<compile_context>
chip_gen: v5e
topology: v5e:2x2
jax: 0.10.0
libtpu: 0.0.40
codegen_flags: <defaults>
</compile_context>

<pallas_src>
import jax
import jax.numpy as jnp
from jax.experimental import pallas as pl
from jax.experimental.pallas import tpu as pltpu


def _round_up(x, m):
    return (x + m - 1) // m * m


def _mlp_kernel(x_ref, w1_ref, b1_ref, w2_ref, b2_ref, w3_ref, b3_ref,
                o_ref, h_ref):
    """One (TB, TV) logits tile of the fused MLP.

    Grid = (batch_tiles, vocab_tiles).  fc1 + ReLU + fc2(+folded BN1) + ReLU
    are computed once per batch tile (j == 0) into the bf16 scratch `h_ref`;
    fc3 (with folded BN2) consumes a streamed (Hp, TV) slice of w3 per vocab
    tile.  Biases / ReLU stay in f32 (v5e-friendly), MXU inputs are bf16 with
    f32 accumulation.
    """
    j = pl.program_id(1)

    @pl.when(j == 0)
    def _():
        # fc1 + bias + ReLU   (dropout1 is identity in eval mode)
        h1 = jnp.dot(x_ref[...], w1_ref[...],
                     preferred_element_type=jnp.float32)
        h1 = jnp.maximum(h1 + b1_ref[...], 0.0)
        # fc2 (BN1 scale/shift folded into w2/b2) + ReLU  (dropout2 identity)
        h2 = jnp.dot(h1.astype(w2_ref.dtype), w2_ref[...],
                     preferred_element_type=jnp.float32)
        h_ref[...] = jnp.maximum(h2 + b2_ref[...], 0.0).astype(h_ref.dtype)

    # fc3 (BN2 folded into w3/b3) on the current vocab tile (bf16 @ bf16 -> f32).
    o_ref[...] = (jnp.dot(h_ref[...], w3_ref[...],
                          preferred_element_type=jnp.float32)
                  + b3_ref[...])


def _vmem_bytes_estimate(TB, TV, Fp, Hp):
    """Rough VMEM footprint of the pipelined buffers (default double-buffering)."""
    nbuf = 2
    total = 0
    total += nbuf * TB * Fp * 2        # x tile        (bf16)
    total += nbuf * Fp * Hp * 2        # w1            (bf16)
    total += nbuf * 8 * Hp * 4         # b1            (f32, sublane-padded)
    total += nbuf * Hp * Hp * 2        # w2 (folded)   (bf16)
    total += nbuf * 8 * Hp * 4         # b2 (folded)   (f32)
    total += nbuf * Hp * TV * 2        # w3 tile       (bf16)
    total += nbuf * 8 * TV * 4         # b3 tile       (f32)
    total += nbuf * TB * TV * 4        # out tile      (f32)
    total += TB * Hp * 2               # hidden scratch (bf16)
    return total


def make_neural_lm2_forward(params, *, eps=1e-5, tv=256, tb=128):
    """Fold BN / pad / cast ONCE and return a jitted eval-mode forward fn.

    Returned fn: context (B, L) int32 -> logits (B, V) f32.
    """
    emb = params["embedding"]                     # (V, E) f32
    V, E = emb.shape
    Fin, H = params["w1"].shape

    # ---- fold eval-mode BatchNorm into the *following* linear layer ----
    #   relu(fc1) -> BN1 -> fc2  ==  relu(fc1) @ (s1[:,None]*w2) + (t1 @ w2 + b2)
    def bn_fold(gamma, beta, mean, var):
        scale = gamma / jnp.sqrt(var + eps)
        return scale, beta - mean * scale

    s1, t1 = bn_fold(params["bn1_gamma"], params["bn1_beta"],
                     params["bn1_mean"], params["bn1_var"])
    s2, t2 = bn_fold(params["bn2_gamma"], params["bn2_beta"],
                     params["bn2_mean"], params["bn2_var"])
    w2f = params["w2"] * s1[:, None]
    b2f = params["b2"] + t1 @ params["w2"]
    w3f = params["w3"] * s2[:, None]
    b3f = params["b3"] + t2 @ params["w3"]

    # ---- pad to lane-dense feature dims, cast MXU operands to bf16 (once) ----
    TV = tv
    Fp = _round_up(Fin, 128)
    Hp = _round_up(H, 128)
    Vp = _round_up(V, TV)

    def pad2(a, r, c):
        return jnp.pad(a, ((0, r - a.shape[0]), (0, c - a.shape[1])))

    embp = jax.device_put(emb.astype(jnp.bfloat16))                     # gather source
    w1p = jax.device_put(pad2(params["w1"], Fp, Hp).astype(jnp.bfloat16))
    b1p = jax.device_put(pad2(params["b1"].reshape(1, H), 1, Hp))       # f32
    w2p = jax.device_put(pad2(w2f, Hp, Hp).astype(jnp.bfloat16))
    b2p = jax.device_put(pad2(b2f.reshape(1, H), 1, Hp))                # f32
    w3p = jax.device_put(pad2(w3f, Hp, Vp).astype(jnp.bfloat16))
    b3p = jax.device_put(pad2(b3f.reshape(1, V), 1, Vp))                # f32

    @jax.jit
    def forward(context):
        B, L = context.shape
        assert L * E == Fin, "context length inconsistent with fc1 fan-in"

        TB = min(tb, _round_up(B, 8))       # rows per batch tile
        Bp = _round_up(B, TB)

        # embedding gather + flatten (matches torch .view(B, -1)), pad batch/feature
        x = embp[context].reshape(B, Fin)
        xp = jnp.pad(x, ((0, Bp - B), (0, Fp - Fin)))

        grid = (Bp // TB, Vp // TV)
        grid_spec = pltpu.PrefetchScalarGridSpec(
            num_scalar_prefetch=0,
            grid=grid,
            in_specs=[
                pl.BlockSpec((TB, Fp), lambda i, j: (i, 0)),   # x: one batch tile
                pl.BlockSpec((Fp, Hp), lambda i, j: (0, 0)),   # w1: resident
                pl.BlockSpec((1, Hp),  lambda i, j: (0, 0)),   # b1
                pl.BlockSpec((Hp, Hp), lambda i, j: (0, 0)),   # w2 (BN1 folded)
                pl.BlockSpec((1, Hp),  lambda i, j: (0, 0)),   # b2 (BN1 folded)
                pl.BlockSpec((Hp, TV), lambda i, j: (0, j)),   # w3 streamed over V
                pl.BlockSpec((1, TV),  lambda i, j: (0, j)),   # b3 (BN2 folded)
            ],
            out_specs=pl.BlockSpec((TB, TV), lambda i, j: (i, j)),
            scratch_shapes=[pltpu.VMEM((TB, Hp), jnp.bfloat16)],  # hidden acts
        )

        vmem_limit = min(128 * 1024 * 1024,
                         max(2 * _vmem_bytes_estimate(TB, TV, Fp, Hp),
                             16 * 1024 * 1024))

        out = pl.pallas_call(
            _mlp_kernel,
            out_shape=jax.ShapeDtypeStruct((Bp, Vp), jnp.float32),
            grid_spec=grid_spec,
            compiler_params=pltpu.CompilerParams(
                # Batch tiles are independent -> shard across TensorCores (v7x).
                # Vocab axis reuses the per-batch-tile scratch -> must stay
                # "arbitrary" (see invariant note at top of file).
                dimension_semantics=("parallel", "arbitrary"),
                vmem_limit_bytes=vmem_limit,
            ),
        )(xp, w1p, b1p, w2p, b2p, w3p, b3p)

        return out[:B, :V]

    return forward


def init_params(key, vocab_size, embedding_dim, hidden_dim, max_length):
    """Deterministic synthetic parameters mirroring the PyTorch module shapes."""
    ks = jax.random.split(key, 10)
    in1 = embedding_dim * max_length

    def lin(k, fan_in, fan_out):
        bound = 1.0 / jnp.sqrt(fan_in)
        kw, kb = jax.random.split(k)
        w = jax.random.uniform(kw, (fan_in, fan_out), jnp.float32, -bound, bound)
        b = jax.random.uniform(kb, (fan_out,), jnp.float32, -bound, bound)
        return w, b

    w1, b1 = lin(ks[1], in1, hidden_dim)
    w2, b2 = lin(ks[2], hidden_dim, hidden_dim)
    w3, b3 = lin(ks[3], hidden_dim, vocab_size)

    return {
        "embedding": jax.random.normal(ks[0], (vocab_size, embedding_dim),
                                       jnp.float32),
        "w1": w1, "b1": b1,
        "w2": w2, "b2": b2,
        "w3": w3, "b3": b3,
        # BatchNorm1d eval-mode running stats / affine params (synthetic).
        "bn1_gamma": 1.0 + 0.1 * jax.random.normal(ks[4], (hidden_dim,), jnp.float32),
        "bn1_beta":  0.1 * jax.random.normal(ks[5], (hidden_dim,), jnp.float32),
        "bn1_mean":  0.1 * jax.random.normal(ks[6], (hidden_dim,), jnp.float32),
        "bn1_var":   jax.random.uniform(ks[7], (hidden_dim,), jnp.float32, 0.5, 1.5),
        "bn2_gamma": 1.0 + 0.1 * jax.random.normal(ks[8], (hidden_dim,), jnp.float32),
        "bn2_beta":  0.1 * jax.random.normal(ks[9], (hidden_dim,), jnp.float32),
        "bn2_mean":  0.05 * jnp.ones((hidden_dim,), jnp.float32),
        "bn2_var":   0.9 * jnp.ones((hidden_dim,), jnp.float32),
    }


if __name__ == "__main__":
    # Shapes consistent with the module defaults (emb=64, hidden=128, seq=10);
    # batch / vocab chosen so both grid axes are actually exercised
    # (grid = (2 batch tiles, 1 vocab tile) after the TV=256 bump).
    VOCAB, EMB, HID, MAXLEN, BATCH = 256, 64, 128, 10, 256

    key = jax.random.PRNGKey(0)
    kp, kc = jax.random.split(key)
    params = init_params(kp, VOCAB, EMB, HID, MAXLEN)
    context = jax.random.randint(kc, (BATCH, MAXLEN), 0, VOCAB, dtype=jnp.int32)

    forward = make_neural_lm2_forward(params)   # fold/pad/cast happen once here
    logits = forward(context)
    jax.block_until_ready(logits)

    # Plain-JAX f32 reference of the same eval-mode forward pass.
    eps = 1e-5
    x = params["embedding"][context].reshape(BATCH, -1)
    h = jnp.maximum(x @ params["w1"] + params["b1"], 0.0)
    h = (h - params["bn1_mean"]) / jnp.sqrt(params["bn1_var"] + eps) \
        * params["bn1_gamma"] + params["bn1_beta"]
    h = jnp.maximum(h @ params["w2"] + params["b2"], 0.0)
    h = (h - params["bn2_mean"]) / jnp.sqrt(params["bn2_var"] + eps) \
        * params["bn2_gamma"] + params["bn2_beta"]
    ref = h @ params["w3"] + params["b3"]

    assert logits.shape == (BATCH, VOCAB)
    # bf16 weights/activations with f32 accumulation -> loose-ish tolerance.
    assert jnp.allclose(logits, ref, atol=5e-2, rtol=5e-2)

    print("KERNEL_OK")
</pallas_src>

<mosaic_0001>
module attributes {stable_mosaic.version = 11 : i64} {
  func.func @_mlp_kernel(%arg0: i32, %arg1: i32, %arg2: memref<128x640xbf16, #tpu.memory_space<vmem>>, %arg3: memref<640x128xbf16, #tpu.memory_space<vmem>>, %arg4: memref<1x128xf32, #tpu.memory_space<vmem>>, %arg5: memref<128x128xbf16, #tpu.memory_space<vmem>>, %arg6: memref<1x128xf32, #tpu.memory_space<vmem>>, %arg7: memref<128x256xbf16, #tpu.memory_space<vmem>>, %arg8: memref<1x256xf32, #tpu.memory_space<vmem>>, %arg9: memref<128x256xf32, #tpu.memory_space<vmem>>, %arg10: memref<128x128xbf16, #tpu.memory_space<vmem>>) attributes {dimension_semantics = [#tpu.dimension_semantics<parallel>, #tpu.dimension_semantics<arbitrary>], iteration_bounds = array<i64: 2, 1>, scalar_prefetch = 0 : i64, scratch_operands = 1 : i64, tpu.core_type = #tpu.core_type<tc>, window_params = [{transform_indices = @transform_0, window_bounds = array<i64: 128, 640>}, {pipeline_mode = #tpu.pipeline_mode<synchronous>, transform_indices = @transform_1, window_bounds = array<i64: 640, 128>}, {pipeline_mode = #tpu.pipeline_mode<synchronous>, transform_indices = @transform_2, window_bounds = array<i64: 1, 128>}, {pipeline_mode = #tpu.pipeline_mode<synchronous>, transform_indices = @transform_3, window_bounds = array<i64: 128, 128>}, {pipeline_mode = #tpu.pipeline_mode<synchronous>, transform_indices = @transform_4, window_bounds = array<i64: 1, 128>}, {transform_indices = @transform_5, window_bounds = array<i64: 128, 256>}, {transform_indices = @transform_6, window_bounds = array<i64: 1, 256>}, {transform_indices = @transform_7, window_bounds = array<i64: 128, 256>}]} {
    %c0_i32 = arith.constant 0 : i32
    %0 = arith.cmpi eq, %arg1, %c0_i32 : i32
    %1 = arith.extui %0 : i1 to i32
    %c0_i32_0 = arith.constant 0 : i32
    %2 = arith.cmpi ne, %1, %c0_i32_0 : i32
    scf.if %2 {
      %c0_8 = arith.constant 0 : index
      %c0_9 = arith.constant 0 : index
      %10 = vector.load %arg2[%c0_8, %c0_9] : memref<128x640xbf16, #tpu.memory_space<vmem>>, vector<128x640xbf16>
      %c0_10 = arith.constant 0 : index
      %c0_11 = arith.constant 0 : index
      %11 = vector.load %arg3[%c0_10, %c0_11] : memref<640x128xbf16, #tpu.memory_space<vmem>>, vector<640x128xbf16>
      %cst_12 = arith.constant dense<0.000000e+00> : vector<128x128xf32>
      %12 = tpu.matmul %10, %11, %cst_12 {dimension_numbers = #tpu.dot_dimension_numbers<[1], [0], [0], [1], [0, 0, 1, 1], [], []>} : vector<128x640xbf16>, vector<640x128xbf16>, vector<128x128xf32> -> vector<128x128xf32>
      %c0_13 = arith.constant 0 : index
      %c0_14 = arith.constant 0 : index
      %13 = vector.load %arg4[%c0_13, %c0_14] : memref<1x128xf32, #tpu.memory_space<vmem>>, vector<1x128xf32>
      %14 = vector.broadcast %13 : vector<1x128xf32> to vector<128x128xf32>
      %15 = arith.addf %12, %14 : vector<128x128xf32>
      %cst_15 = arith.constant 0.000000e+00 : f32
      %16 = vector.broadcast %cst_15 : f32 to vector<128x128xf32>
      %17 = arith.maximumf %15, %16 : vector<128x128xf32>
      %18 = arith.truncf %17 : vector<128x128xf32> to vector<128x128xbf16>
      %c0_16 = arith.constant 0 : index
      %c0_17 = arith.constant 0 : index
      %19 = vector.load %arg5[%c0_16, %c0_17] : memref<128x128xbf16, #tpu.memory_space<vmem>>, vector<128x128xbf16>
      %cst_18 = arith.constant dense<0.000000e+00> : vector<128x128xf32>
      %20 = tpu.matmul %18, %19, %cst_18 {dimension_numbers = #tpu.dot_dimension_numbers<[1], [0], [0], [1], [0, 0, 1, 1], [], []>} : vector<128x128xbf16>, vector<128x128xbf16>, vector<128x128xf32> -> vector<128x128xf32>
      %c0_19 = arith.constant 0 : index
      %c0_20 = arith.constant 0 : index
      %21 = vector.load %arg6[%c0_19, %c0_20] : memref<1x128xf32, #tpu.memory_space<vmem>>, vector<1x128xf32>
      %22 = vector.broadcast %21 : vector<1x128xf32> to vector<128x128xf32>
      %23 = arith.addf %20, %22 : vector<128x128xf32>
      %cst_21 = arith.constant 0.000000e+00 : f32
      %24 = vector.broadcast %cst_21 : f32 to vector<128x128xf32>
      %25 = arith.maximumf %23, %24 : vector<128x128xf32>
      %26 = arith.truncf %25 : vector<128x128xf32> to vector<128x128xbf16>
      %c0_22 = arith.constant 0 : index
      %c0_23 = arith.constant 0 : index
      %27 = vector.load %arg10[%c0_22, %c0_23] : memref<128x128xbf16, #tpu.memory_space<vmem>>, vector<128x128xbf16>
      tpu.vector_store %arg10[%c0_22, %c0_23], %26 {strides = array<i32>} : memref<128x128xbf16, #tpu.memory_space<vmem>>, vector<128x128xbf16>,
    } else {
    }
    %c0 = arith.constant 0 : index
    %c0_1 = arith.constant 0 : index
    %3 = vector.load %arg10[%c0, %c0_1] : memref<128x128xbf16, #tpu.memory_space<vmem>>, vector<128x128xbf16>
    %c0_2 = arith.constant 0 : index
    %c0_3 = arith.constant 0 : index
    %4 = vector.load %arg7[%c0_2, %c0_3] : memref<128x256xbf16, #tpu.memory_space<vmem>>, vector<128x256xbf16>
    %cst = arith.constant dense<0.000000e+00> : vector<128x256xf32>
    %5 = tpu.matmul %3, %4, %cst {dimension_numbers = #tpu.dot_dimension_numbers<[1], [0], [0], [1], [0, 0, 1, 1], [], []>} : vector<128x128xbf16>, vector<128x256xbf16>, vector<128x256xf32> -> vector<128x256xf32>
    %c0_4 = arith.constant 0 : index
    %c0_5 = arith.constant 0 : index
    %6 = vector.load %arg8[%c0_4, %c0_5] : memref<1x256xf32, #tpu.memory_space<vmem>>, vector<1x256xf32>
    %7 = vector.broadcast %6 : vector<1x256xf32> to vector<128x256xf32>
    %8 = arith.addf %5, %7 : vector<128x256xf32>
    %c0_6 = arith.constant 0 : index
    %c0_7 = arith.constant 0 : index
    %9 = vector.load %arg9[%c0_6, %c0_7] : memref<128x256xf32, #tpu.memory_space<vmem>>, vector<128x256xf32>
    tpu.vector_store %arg9[%c0_6, %c0_7], %8 {strides = array<i32>} : memref<128x256xf32, #tpu.memory_space<vmem>>, vector<128x256xf32>,
    return
  }
  func.func @transform_0(%arg0: i32, %arg1: i32) -> (i32, i32) {
    %c0_i32 = arith.constant 0 : i32
    %c0_i32_0 = arith.constant 0 : i32
    return %arg0, %c0_i32 : i32, i32
  }
  func.func @transform_1(%arg0: i32, %arg1: i32) -> (i32, i32) {
    %c0_i32 = arith.constant 0 : i32
    %c0_i32_0 = arith.constant 0 : i32
    %c0_i32_1 = arith.constant 0 : i32
    return %c0_i32, %c0_i32_0 : i32, i32
  }
  func.func @transform_2(%arg0: i32, %arg1: i32) -> (i32, i32) {
    %c0_i32 = arith.constant 0 : i32
    %c0_i32_0 = arith.constant 0 : i32
    %c0_i32_1 = arith.constant 0 : i32
    return %c0_i32, %c0_i32_0 : i32, i32
  }
  func.func @transform_3(%arg0: i32, %arg1: i32) -> (i32, i32) {
    %c0_i32 = arith.constant 0 : i32
    %c0_i32_0 = arith.constant 0 : i32
    %c0_i32_1 = arith.constant 0 : i32
    return %c0_i32, %c0_i32_0 : i32, i32
  }
  func.func @transform_4(%arg0: i32, %arg1: i32) -> (i32, i32) {
    %c0_i32 = arith.constant 0 : i32
    %c0_i32_0 = arith.constant 0 : i32
    %c0_i32_1 = arith.constant 0 : i32
    return %c0_i32, %c0_i32_0 : i32, i32
  }
  func.func @transform_5(%arg0: i32, %arg1: i32) -> (i32, i32) {
    %c0_i32 = arith.constant 0 : i32
    %c0_i32_0 = arith.constant 0 : i32
    return %c0_i32, %arg1 : i32, i32
  }
  func.func @transform_6(%arg0: i32, %arg1: i32) -> (i32, i32) {
    %c0_i32 = arith.constant 0 : i32
    %c0_i32_0 = arith.constant 0 : i32
    return %c0_i32, %arg1 : i32, i32
  }
  func.func @transform_7(%arg0: i32, %arg1: i32) -> (i32, i32) {
    %c0_i32 = arith.constant 0 : i32
    return %arg0, %arg1 : i32, i32
  }
}

</mosaic_0001>

<llo_original>
// kernel: forward.1
$region0: #{forward.1}
  #allocation0 [shape = 'u32[]', space=smem, size = 0x4, offset = 0x4, fixed_abs, tag = 'smem constant byte address 0x4 - core index']
  #allocation1 [shape = 'u32[72,128]{1,0:T(1,128)}', space=vmem, size = 0x9000, scoped, tag = 'internal scratch']
  #allocation2 [shape = 'bf16[128,128]{1,0:T(8,128)(2,1)}', space=vmem, size = 0x8000, scoped, tag = 'scratch operand']
  %s0 = inlined_call_operand.vmem [shape: bf16[256,640], index: 0, kind: input, shape index: {}]
  %s1 = inlined_call_operand.vmem [shape: bf16[640,128], index: 1, kind: input, shape index: {}]
  %s2 = inlined_call_operand.vmem [shape: f32[1,128], index: 2, kind: input, shape index: {}]
  %s3 = inlined_call_operand.vmem [shape: bf16[128,128], index: 3, kind: input, shape index: {}]
  %s4 = inlined_call_operand.vmem [shape: f32[1,128], index: 4, kind: input, shape index: {}]
  %s5 = inlined_call_operand.vmem [shape: bf16[128,256], index: 5, kind: input, shape index: {}]
  %s6 = inlined_call_operand.vmem [shape: f32[1,256], index: 6, kind: input, shape index: {}]
  %s7 = inlined_call_operand.hbm [shape: f32[256,256], index: 7, kind: output, shape index: {}]
  %s8 = sld [smem:[#allocation0]]
  $region65: #{forward.1} parent=0
    _
  %s10 = ssub.s32 1, %s8
  %s11 = scalar_select 0, %s10, %s8
  $region1: #{forward.1} parent=0
    #allocation3 [shape = 'u8[262144]{0}', space=vmem, size = 0x40000, scoped, tag = 'output window, operand 0']
    #allocation4 [shape = 's32[2]{0}', space=sflag, size = 0x8, scoped, tag = 'scoped memory for forward.1']
    %12 = vsyncpa [#allocation4], 0
    %s13 = scalar_lea.sflag [#allocation4], 1
    %14 = vsyncpa %s13, 0
    loop: start=0, step=1, limit=4
    $region2: #{forward.1} parent=1 // loop_pre_header
      _
    $region3: #{forward.1} parent=1 // loop_header
      %s16 = sphi 0, %s20
      %p17 = scmp.ge.s32.totalorder %s16, 4
      %s23 = sphi 0, %s35
      %s24 = sphi 0, %s31
      %s25 = sphi 0, %s23
      %s26 = sphi 0, %s24
      %s27 = sphi 0, %s25
      %s28 = sphi 0, %s26
      %s38 = sphi 0, %s40
      %s41 = sphi 0, %s38
      %s42 = sphi 0, %s41
      %s58 = sphi 0, %s42
      %s62 = sphi 0, %s62
      %s64 = sphi 0, %s62
      %s65 = sphi 0, %s64
      %s79 = sphi 0, %s65
      %s83 = sphi 0, %s83
      %s85 = sphi 0, %s83
      %s86 = sphi 0, %s85
      %s100 = sphi 0, %s86
      %s104 = sphi 0, %s104
      %s106 = sphi 0, %s104
      %s107 = sphi 0, %s106
      %s121 = sphi 0, %s107
      %s125 = sphi 0, %s125
      %s127 = sphi 0, %s125
      %s128 = sphi 0, %s127
      %s142 = sphi 0, %s128
      %s148 = sphi 0, %s150
      %s151 = sphi 0, %s148
      %s152 = sphi 0, %s151
      %s168 = sphi 0, %s152
      %s174 = sphi 0, %s176
      %s177 = sphi 0, %s174
      %s178 = sphi 0, %s177
      %s194 = sphi 0, %s178
      %s202 = sphi 0, %s204
      %s205 = sphi 0, %s202
      %s206 = sphi 0, %s205
      %s222 = sphi 0, %s206
    $region4: #{forward.1} parent=1 // loop_header_branch
      %19 = sbr.rel (%p17) target = $region8
    $region5: #{forward.1} parent=1 // loop_body
      %s21 = ssub.s32 %s16, 1
      %s22 = ssub.s32 %s16, 2
      %s29 = sadd.s32 1, %s24
      %p30 = scmp.ge.s32.totalorder %s29, 1
      %s31 = scalar_select %p30, 0, %s29
      %s32 = sadd.s32 1, %s23
      %s33 = scalar_select %p30, %s32, %s23
      %p34 = scmp.ge.s32.totalorder %s33, 2
      %s35 = scalar_select %p34, 0, %s33
      %s36 = ssub.s32 %s23, %s35
      %p37 = scmp.eq.s32.totalorder %s36, 0
      %s39 = sadd.s32 %s38, 1
      %s40 = scalar_select %p37, %s38, %s39
      %p43 = pneg %p37
      %p44 = scmp.eq.s32.totalorder %s16, 1
      %p45 = por %p43, %p44
      %p46 = scmp.ne.s32.totalorder %s38, %s41
      %p47 = scmp.eq.s32.totalorder %s16, 0
      %p48 = por %p46, %p47
      %p49 = scmp.ne.s32.totalorder %s38, %s41
      %p50 = scmp.eq.s32.totalorder %s21, 1
      %p51 = por %p49, %p50
      %p52 = scmp.ne.s32.totalorder %s41, %s42
      %p53 = scmp.eq.s32.totalorder %s21, 0
      %p54 = por %p52, %p53
      %p55 = scmp.ne.s32.totalorder %s41, %s42
      %p56 = scmp.eq.s32.totalorder %s22, 1
      %p57 = por %p55, %p56
      %p59 = scmp.ne.s32.totalorder %s42, %s58
      %p60 = scmp.eq.s32.totalorder %s22, 0
      %p61 = por %p59, %p60
      %s63 = sadd.s32 %s62, 1
      %p66 = scmp.eq.s32.totalorder %s16, 1
      %p67 = scmp.ne.s32.totalorder %s62, %s64
      %p68 = scmp.eq.s32.totalorder %s16, 0
      %p69 = por %p67, %p68
      %p70 = scmp.ne.s32.totalorder %s62, %s64
      %p71 = scmp.eq.s32.totalorder %s21, 1
      %p72 = por %p70, %p71
      %p73 = scmp.ne.s32.totalorder %s64, %s65
      %p74 = scmp.eq.s32.totalorder %s21, 0
      %p75 = por %p73, %p74
      %p76 = scmp.ne.s32.totalorder %s64, %s65
      %p77 = scmp.eq.s32.totalorder %s22, 1
      %p78 = por %p76, %p77
      %p80 = scmp.ne.s32.totalorder %s65, %s79
      %p81 = scmp.eq.s32.totalorder %s22, 0
      %p82 = por %p80, %p81
      %s84 = sadd.s32 %s83, 1
      %p87 = scmp.eq.s32.totalorder %s16, 1
      %p88 = scmp.ne.s32.totalorder %s83, %s85
      %p89 = scmp.eq.s32.totalorder %s16, 0
      %p90 = por %p88, %p89
      %p91 = scmp.ne.s32.totalorder %s83, %s85
      %p92 = scmp.eq.s32.totalorder %s21, 1
      %p93 = por %p91, %p92
      %p94 = scmp.ne.s32.totalorder %s85, %s86
      %p95 = scmp.eq.s32.totalorder %s21, 0
      %p96 = por %p94, %p95
      %p97 = scmp.ne.s32.totalorder %s85, %s86
      %p98 = scmp.eq.s32.totalorder %s22, 1
      %p99 = por %p97, %p98
      %p101 = scmp.ne.s32.totalorder %s86, %s100
      %p102 = scmp.eq.s32.totalorder %s22, 0
      %p103 = por %p101, %p102
      %s105 = sadd.s32 %s104, 1
      %p108 = scmp.eq.s32.totalorder %s16, 1
      %p109 = scmp.ne.s32.totalorder %s104, %s106
      %p110 = scmp.eq.s32.totalorder %s16, 0
      %p111 = por %p109, %p110
      %p112 = scmp.ne.s32.totalorder %s104, %s106
      %p113 = scmp.eq.s32.totalorder %s21, 1
      %p114 = por %p112, %p113
      %p115 = scmp.ne.s32.totalorder %s106, %s107
      %p116 = scmp.eq.s32.totalorder %s21, 0
      %p117 = por %p115, %p116
      %p118 = scmp.ne.s32.totalorder %s106, %s107
      %p119 = scmp.eq.s32.totalorder %s22, 1
      %p120 = por %p118, %p119
      %p122 = scmp.ne.s32.totalorder %s107, %s121
      %p123 = scmp.eq.s32.totalorder %s22, 0
      %p124 = por %p122, %p123
      %s126 = sadd.s32 %s125, 1
      %p129 = scmp.eq.s32.totalorder %s16, 1
      %p130 = scmp.ne.s32.totalorder %s125, %s127
      %p131 = scmp.eq.s32.totalorder %s16, 0
      %p132 = por %p130, %p131
      %p133 = scmp.ne.s32.totalorder %s125, %s127
      %p134 = scmp.eq.s32.totalorder %s21, 1
      %p135 = por %p133, %p134
      %p136 = scmp.ne.s32.totalorder %s127, %s128
      %p137 = scmp.eq.s32.totalorder %s21, 0
      %p138 = por %p136, %p137
      %p139 = scmp.ne.s32.totalorder %s127, %s128
      %p140 = scmp.eq.s32.totalorder %s22, 1
      %p141 = por %p139, %p140
      %p143 = scmp.ne.s32.totalorder %s128, %s142
      %p144 = scmp.eq.s32.totalorder %s22, 0
      %p145 = por %p143, %p144
      %s146 = ssub.s32 %s24, %s31
      %p147 = scmp.eq.s32.totalorder %s146, 0
      %s149 = sadd.s32 %s148, 1
      %s150 = scalar_select %p147, %s148, %s149
      %p153 = pneg %p147
      %p154 = scmp.eq.s32.totalorder %s16, 1
      %p155 = por %p153, %p154
      %p156 = scmp.ne.s32.totalorder %s148, %s151
      %p157 = scmp.eq.s32.totalorder %s16, 0
      %p158 = por %p156, %p157
      %p159 = scmp.ne.s32.totalorder %s148, %s151
      %p160 = scmp.eq.s32.totalorder %s21, 1
      %p161 = por %p159, %p160
      %p162 = scmp.ne.s32.totalorder %s151, %s152
      %p163 = scmp.eq.s32.totalorder %s21, 0
      %p164 = por %p162, %p163
      %p165 = scmp.ne.s32.totalorder %s151, %s152
      %p166 = scmp.eq.s32.totalorder %s22, 1
      %p167 = por %p165, %p166
      %p169 = scmp.ne.s32.totalorder %s152, %s168
      %p170 = scmp.eq.s32.totalorder %s22, 0
      %p171 = por %p169, %p170
      %s172 = ssub.s32 %s24, %s31
      %p173 = scmp.eq.s32.totalorder %s172, 0
      %s175 = sadd.s32 %s174, 1
      %s176 = scalar_select %p173, %s174, %s175
      %p179 = pneg %p173
      %p180 = scmp.eq.s32.totalorder %s16, 1
      %p181 = por %p179, %p180
      %p182 = scmp.ne.s32.totalorder %s174, %s177
      %p183 = scmp.eq.s32.totalorder %s16, 0
      %p184 = por %p182, %p183
      %p185 = scmp.ne.s32.totalorder %s174, %s177
      %p186 = scmp.eq.s32.totalorder %s21, 1
      %p187 = por %p185, %p186
      %p188 = scmp.ne.s32.totalorder %s177, %s178
      %p189 = scmp.eq.s32.totalorder %s21, 0
      %p190 = por %p188, %p189
      %p191 = scmp.ne.s32.totalorder %s177, %s178
      %p192 = scmp.eq.s32.totalorder %s22, 1
      %p193 = por %p191, %p192
      %p195 = scmp.ne.s32.totalorder %s178, %s194
      %p196 = scmp.eq.s32.totalorder %s22, 0
      %p197 = por %p195, %p196
      %s198 = ssub.s32 %s23, %s35
      %s199 = ssub.s32 %s24, %s31
      %s200 = sor.u32 %s198, %s199
      %p201 = scmp.eq.s32.totalorder %s200, 0
      %s203 = sadd.s32 %s202, 1
      %s204 = scalar_select %p201, %s202, %s203
      %p207 = pneg %p201
      %p208 = scmp.eq.s32.totalorder %s16, 1
      %p209 = por %p207, %p208
      %p210 = scmp.ne.s32.totalorder %s202, %s205
      %p211 = scmp.eq.s32.totalorder %s16, 0
      %p212 = por %p210, %p211
      %p213 = scmp.ne.s32.totalorder %s202, %s205
      %p214 = scmp.eq.s32.totalorder %s21, 1
      %p215 = por %p213, %p214
      %p216 = scmp.ne.s32.totalorder %s205, %s206
      %p217 = scmp.eq.s32.totalorder %s21, 0
      %p218 = por %p216, %p217
      %p219 = scmp.ne.s32.totalorder %s205, %s206
      %p220 = scmp.eq.s32.totalorder %s22, 1
      %p221 = por %p219, %p220
      %p223 = scmp.ne.s32.totalorder %s206, %s222
      %p224 = scmp.eq.s32.totalorder %s22, 0
      %p225 = por %p223, %p224
      %p226 = scmp.le.s32.totalorder 1, %s16
      %p227 = scmp.lt.s32.totalorder %s16, 3
      %p228 = pnand %p226, %p227
      %p229 = pneg %p228
      // Predicated region
      $region9: #{forward.1} parent=5 // pred_check
        _
      $region10: #{forward.1} parent=5 // pred_check_branch
        %231 = sbr.rel (%p228) target = $region12
      $region11: #{forward.1} parent=5 // pred_region
        %s232 = ssub.s32 %s16, 1
        // Predicated region
        $region13: #{forward.1} parent=11 // pred_check
          %p233 = pneg %p75
        $region14: #{forward.1} parent=11 // pred_check_branch
          %235 = sbr.rel (%p233) target = $region16
        $region15: #{forward.1} parent=11 // pred_region
          _
        $region16: #{forward.1} parent=11 // pred_fallthru
          _
        // Predicated region
        $region17: #{forward.1} parent=11 // pred_check
          %p236 = pneg %p96
        $region18: #{forward.1} parent=11 // pred_check_branch
          %238 = sbr.rel (%p236) target = $region20
        $region19: #{forward.1} parent=11 // pred_region
          _
        $region20: #{forward.1} parent=11 // pred_fallthru
          _
        // Predicated region
        $region21: #{forward.1} parent=11 // pred_check
          %p239 = pneg %p117
        $region22: #{forward.1} parent=11 // pred_check_branch
          %241 = sbr.rel (%p239) target = $region24
        $region23: #{forward.1} parent=11 // pred_region
          _
        $region24: #{forward.1} parent=11 // pred_fallthru
          _
        // Predicated region
        $region25: #{forward.1} parent=11 // pred_check
          %p242 = pneg %p138
        $region26: #{forward.1} parent=11 // pred_check_branch
          %244 = sbr.rel (%p242) target = $region28
        $region27: #{forward.1} parent=11 // pred_region
          _
        $region28: #{forward.1} parent=11 // pred_fallthru
          _
        // Predicated region
        $region29: #{forward.1} parent=11 // pred_check
          %p245 = pneg %p164
        $region30: #{forward.1} parent=11 // pred_check_branch
          %247 = sbr.rel (%p245) target = $region32
        $region31: #{forward.1} parent=11 // pred_region
          %s248 = smul.u32 2, %s26
          %p249 = scmp.lt.s32.totalorder %s248, 1
          %s250 = scalar_select %p249, %s248, 1
          %s251 = smul.addr %s250, 4
          %s252 = scalar_lea.vmem %s5, %s251
          %s253 = smul.u32 2, %s26
        $region32: #{forward.1} parent=11 // pred_fallthru
          _
        // Predicated region
        $region33: #{forward.1} parent=11 // pred_check
          %p254 = pneg %p190
        $region34: #{forward.1} parent=11 // pred_check_branch
          %256 = sbr.rel (%p254) target = $region36
        $region35: #{forward.1} parent=11 // pred_region
          %s257 = smul.u32 2, %s26
          %p258 = scmp.lt.s32.totalorder %s257, 1
          %s259 = scalar_select %p258, %s257, 1
          %s260 = scalar_lea.vmem %s6, %s259
          %s261 = smul.u32 2, %s26
        $region36: #{forward.1} parent=11 // pred_fallthru
          _
      $region12: #{forward.1} parent=5 // pred_fallthru
        _
      %p262 = scmp.lt.s32.totalorder %s16, 2
      // Predicated region
      $region37: #{forward.1} parent=5 // pred_check
        %p263 = pneg %p262
      $region38: #{forward.1} parent=5 // pred_check_branch
        %265 = sbr.rel (%p263) target = $region40
      $region39: #{forward.1} parent=5 // pred_region
        // Predicated region
        $region41: #{forward.1} parent=39 // pred_check
          %p266 = pneg %p48
        $region42: #{forward.1} parent=39 // pred_check_branch
          %268 = sbr.rel (%p266) target = $region44
        $region43: #{forward.1} parent=39 // pred_region
          %s269 = smul.u32 16, %s23
          %p270 = scmp.lt.s32.totalorder %s269, 31
          %s271 = scalar_select %p270, %s269, 31
          %s272 = smul.addr %s271, 5
          %s273 = smul.addr %s272, 4
          %s274 = scalar_lea.vmem %s0, %s273
          %s275 = smul.u32 16, %s23
        $region44: #{forward.1} parent=39 // pred_fallthru
          _
      $region40: #{forward.1} parent=5 // pred_fallthru
        _
      %p276 = scmp.le.s32.totalorder 1, %s16
      %p277 = scmp.lt.s32.totalorder %s16, 3
      %p278 = pnand %p276, %p277
      %p279 = pneg %p278
      // Predicated region
      $region45: #{forward.1} parent=5 // pred_check
        _
      $region46: #{forward.1} parent=5 // pred_check_branch
        %281 = sbr.rel (%p278) target = $region48
      $region47: #{forward.1} parent=5 // pred_region
        %s282 = ssub.s32 %s16, 1
        %s283 = smul.u32 16, %s25
        %p284 = scmp.lt.s32.totalorder %s283, 31
        %s285 = scalar_select %p284, %s283, 31
        %s286 = smul.addr %s285, 5
        %s287 = smul.addr %s286, 4
        %s288 = scalar_lea.vmem %s0, %s287
        %p289 = pneg %p54
        %p290 = pneg %p51
        %p291 = pneg %p75
        %p292 = pneg %p72
        %p293 = pneg %p96
        %p294 = pneg %p93
        %p295 = pneg %p117
        %p296 = pneg %p114
        %p297 = pneg %p138
        %p298 = pneg %p135
        %s299 = smul.u32 2, %s26
        %p300 = scmp.lt.s32.totalorder %s299, 1
        %s301 = scalar_select %p300, %s299, 1
        %s302 = smul.addr %s301, 4
        %s303 = scalar_lea.vmem %s5, %s302
        %p304 = pneg %p164
        %p305 = pneg %p161
        %s306 = smul.u32 2, %s26
        %p307 = scmp.lt.s32.totalorder %s306, 1
        %s308 = scalar_select %p307, %s306, 1
        %s309 = scalar_lea.vmem %s6, %s308
        %p310 = pneg %p190
        %p311 = pneg %p187
        %p312 = pneg %p218
        %p313 = pneg %p215
        %s314 = sand.u32 %s205, 1
        %s315 = scalar_lea.sflag [#allocation4], %s314
        %s316 = sand.u32 %s205, 1
        %s317 = smul.addr %s316, 256
        %s318 = scalar_lea.vmem [#allocation3], %s317
        %s319 = smul.u32 16, %s25
        %p320 = scmp.lt.s32.totalorder %s319, 31
        %s321 = scalar_select %p320, %s319, 31
        %s322 = smul.addr %s321, 5
        %s323 = smul.addr %s322, 4
        %s324 = scalar_lea.vmem %s0, %s323
        %s325 = smul.u32 16, %s25
        %s326 = smul.u32 2, %s26
        %p327 = scmp.lt.s32.totalorder %s326, 1
        %s328 = scalar_select %p327, %s326, 1
        %s329 = smul.addr %s328, 4
        %s330 = scalar_lea.vmem %s5, %s329
        %s331 = smul.u32 2, %s26
        %s332 = smul.u32 2, %s26
        %p333 = scmp.lt.s32.totalorder %s332, 1
        %s334 = scalar_select %p333, %s332, 1
        %s335 = scalar_lea.vmem %s6, %s334
        %s336 = smul.u32 2, %s26
        %s337 = smul.u32 16, %s25
        %s338 = smul.u32 2, %s26
        %p339 = scmp.eq.s32.totalorder %s26, 0
        // Predicated region
        $region49: #{forward.1} parent=47 // pred_check
          %p340 = pneg %p339
        $region50: #{forward.1} parent=47 // pred_check_branch
          %342 = sbr.rel (%p340) target = $region52
        $region51: #{forward.1} parent=47 // pred_region
          %v343 = vld [vmem:[%s324] sm:$0xff]
          %v344 = vld [vmem:[%s324 + $0x8] sm:$0xff]
          %v345 = vld [vmem:[%s324 + $0x10] sm:$0xf]
          %v346 = vld [vmem:[%s324 + $0x14] sm:$0xff]
          %v347 = vld [vmem:[%s324 + $0x1c] sm:$0xff]
          %v348 = vld [vmem:[%s324 + $0x24] sm:$0xf]
          %v349 = vld [vmem:[%s324 + $0x28] sm:$0xff]
          %v350 = vld [vmem:[%s324 + $0x30] sm:$0xff]
          %v351 = vld [vmem:[%s324 + $0x38] sm:$0xf]
          %v352 = vld [vmem:[%s324 + $0x3c] sm:$0xff]
          %v353 = vld [vmem:[%s324 + $0x44] sm:$0xff]
          %v354 = vld [vmem:[%s324 + $0x4c] sm:$0xf]
          %v355 = vld [vmem:[%s324 + $0x50] sm:$0xff]
          %v356 = vld [vmem:[%s324 + $0x58] sm:$0xff]
          %v357 = vld [vmem:[%s324 + $0x60] sm:$0xf]
          %v358 = vld [vmem:[%s324 + $0x64] sm:$0xff]
          %v359 = vld [vmem:[%s324 + $0x6c] sm:$0xff]
          %v360 = vld [vmem:[%s324 + $0x74] sm:$0xf]
          %v361 = vld [vmem:[%s324 + $0x78] sm:$0xff]
          %v362 = vld [vmem:[%s324 + $0x80] sm:$0xff]
          %v363 = vld [vmem:[%s324 + $0x88] sm:$0xf]
          %v364 = vld [vmem:[%s324 + $0x8c] sm:$0xff]
          %v365 = vld [vmem:[%s324 + $0x94] sm:$0xff]
          %v366 = vld [vmem:[%s324 + $0x9c] sm:$0xf]
          %v367 = vld [vmem:[%s324 + $0xa0] sm:$0xff]
          %v368 = vld [vmem:[%s324 + $0xa8] sm:$0xff]
          %v369 = vld [vmem:[%s324 + $0xb0] sm:$0xf]
          %v370 = vld [vmem:[%s324 + $0xb4] sm:$0xff]
          %v371 = vld [vmem:[%s324 + $0xbc] sm:$0xff]
          %v372 = vld [vmem:[%s324 + $0xc4] sm:$0xf]
          %v373 = vld [vmem:[%s324 + $0xc8] sm:$0xff]
          %v374 = vld [vmem:[%s324 + $0xd0] sm:$0xff]
          %v375 = vld [vmem:[%s324 + $0xd8] sm:$0xf]
          %v376 = vld [vmem:[%s324 + $0xdc] sm:$0xff]
          %v377 = vld [vmem:[%s324 + $0xe4] sm:$0xff]
          %v378 = vld [vmem:[%s324 + $0xec] sm:$0xf]
          %v379 = vld [vmem:[%s324 + $0xf0] sm:$0xff]
          %v380 = vld [vmem:[%s324 + $0xf8] sm:$0xff]
          %v381 = vld [vmem:[%s324 + $0x100] sm:$0xf]
          %v382 = vld [vmem:[%s324 + $0x104] sm:$0xff]
          %v383 = vld [vmem:[%s324 + $0x10c] sm:$0xff]
          %v384 = vld [vmem:[%s324 + $0x114] sm:$0xf]
          %v385 = vld [vmem:[%s324 + $0x118] sm:$0xff]
          %v386 = vld [vmem:[%s324 + $0x120] sm:$0xff]
          %v387 = vld [vmem:[%s324 + $0x128] sm:$0xf]
          %v388 = vld [vmem:[%s324 + $0x12c] sm:$0xff]
          %v389 = vld [vmem:[%s324 + $0x134] sm:$0xff]
          %v390 = vld [vmem:[%s324 + $0x13c] sm:$0xf]
          %v391 = vld [vmem:[%s1] sm:$0xf]
          %v392 = vld [vmem:[%s1 + $0x4] sm:$0xf]
          %v393 = vld [vmem:[%s1 + $0x8] sm:$0xf]
          %v394 = vld [vmem:[%s1 + $0xc] sm:$0xf]
          %v395 = vld [vmem:[%s1 + $0x10] sm:$0xf]
          %v396 = vld [vmem:[%s1 + $0x14] sm:$0xf]
          %v397 = vld [vmem:[%s1 + $0x18] sm:$0xf]
          %v398 = vld [vmem:[%s1 + $0x1c] sm:$0xf]
          %v399 = vld [vmem:[%s1 + $0x20] sm:$0xf]
          %v400 = vld [vmem:[%s1 + $0x24] sm:$0xf]
          %v401 = vld [vmem:[%s1 + $0x28] sm:$0xf]
          %v402 = vld [vmem:[%s1 + $0x2c] sm:$0xf]
          %v403 = vld [vmem:[%s1 + $0x30] sm:$0xf]
          %v404 = vld [vmem:[%s1 + $0x34] sm:$0xf]
          %v405 = vld [vmem:[%s1 + $0x38] sm:$0xf]
          %v406 = vld [vmem:[%s1 + $0x3c] sm:$0xf]
          %v407 = vld [vmem:[%s1 + $0x40] sm:$0xf]
          %v408 = vld [vmem:[%s1 + $0x44] sm:$0xf]
          %v409 = vld [vmem:[%s1 + $0x48] sm:$0xf]
          %v410 = vld [vmem:[%s1 + $0x4c] sm:$0xf]
          %v411 = vld [vmem:[%s1 + $0x50] sm:$0xf]
          %v412 = vld [vmem:[%s1 + $0x54] sm:$0xf]
          %v413 = vld [vmem:[%s1 + $0x58] sm:$0xf]
          %v414 = vld [vmem:[%s1 + $0x5c] sm:$0xf]
          %v415 = vld [vmem:[%s1 + $0x60] sm:$0xf]
          %v416 = vld [vmem:[%s1 + $0x64] sm:$0xf]
          %v417 = vld [vmem:[%s1 + $0x68] sm:$0xf]
          %v418 = vld [vmem:[%s1 + $0x6c] sm:$0xf]
          %v419 = vld [vmem:[%s1 + $0x70] sm:$0xf]
          %v420 = vld [vmem:[%s1 + $0x74] sm:$0xf]
          %v421 = vld [vmem:[%s1 + $0x78] sm:$0xf]
          %v422 = vld [vmem:[%s1 + $0x7c] sm:$0xf]
          %v423 = vld [vmem:[%s1 + $0x80] sm:$0xf]
          %v424 = vld [vmem:[%s1 + $0x84] sm:$0xf]
          %v425 = vld [vmem:[%s1 + $0x88] sm:$0xf]
          %v426 = vld [vmem:[%s1 + $0x8c] sm:$0xf]
          %v427 = vld [vmem:[%s1 + $0x90] sm:$0xf]
          %v428 = vld [vmem:[%s1 + $0x94] sm:$0xf]
          %v429 = vld [vmem:[%s1 + $0x98] sm:$0xf]
          %v430 = vld [vmem:[%s1 + $0x9c] sm:$0xf]
          %v431 = vld [vmem:[%s1 + $0xa0] sm:$0xf]
          %v432 = vld [vmem:[%s1 + $0xa4] sm:$0xf]
          %v433 = vld [vmem:[%s1 + $0xa8] sm:$0xf]
          %v434 = vld [vmem:[%s1 + $0xac] sm:$0xf]
          %v435 = vld [vmem:[%s1 + $0xb0] sm:$0xf]
          %v436 = vld [vmem:[%s1 + $0xb4] sm:$0xf]
          %v437 = vld [vmem:[%s1 + $0xb8] sm:$0xf]
          %v438 = vld [vmem:[%s1 + $0xbc] sm:$0xf]
          %v439 = vld [vmem:[%s1 + $0xc0] sm:$0xf]
          %v440 = vld [vmem:[%s1 + $0xc4] sm:$0xf]
          %v441 = vld [vmem:[%s1 + $0xc8] sm:$0xf]
          %v442 = vld [vmem:[%s1 + $0xcc] sm:$0xf]
          %v443 = vld [vmem:[%s1 + $0xd0] sm:$0xf]
          %v444 = vld [vmem:[%s1 + $0xd4] sm:$0xf]
          %v445 = vld [vmem:[%s1 + $0xd8] sm:$0xf]
          %v446 = vld [vmem:[%s1 + $0xdc] sm:$0xf]
          %v447 = vld [vmem:[%s1 + $0xe0] sm:$0xf]
          %v448 = vld [vmem:[%s1 + $0xe4] sm:$0xf]
          %v449 = vld [vmem:[%s1 + $0xe8] sm:$0xf]
          %v450 = vld [vmem:[%s1 + $0xec] sm:$0xf]
          %v451 = vld [vmem:[%s1 + $0xf0] sm:$0xf]
          %v452 = vld [vmem:[%s1 + $0xf4] sm:$0xf]
          %v453 = vld [vmem:[%s1 + $0xf8] sm:$0xf]
          %v454 = vld [vmem:[%s1 + $0xfc] sm:$0xf]
          %v455 = vld [vmem:[%s1 + $0x100] sm:$0xf]
          %v456 = vld [vmem:[%s1 + $0x104] sm:$0xf]
          %v457 = vld [vmem:[%s1 + $0x108] sm:$0xf]
          %v458 = vld [vmem:[%s1 + $0x10c] sm:$0xf]
          %v459 = vld [vmem:[%s1 + $0x110] sm:$0xf]
          %v460 = vld [vmem:[%s1 + $0x114] sm:$0xf]
          %v461 = vld [vmem:[%s1 + $0x118] sm:$0xf]
          %v462 = vld [vmem:[%s1 + $0x11c] sm:$0xf]
          %v463 = vld [vmem:[%s1 + $0x120] sm:$0xf]
          %v464 = vld [vmem:[%s1 + $0x124] sm:$0xf]
          %v465 = vld [vmem:[%s1 + $0x128] sm:$0xf]
          %v466 = vld [vmem:[%s1 + $0x12c] sm:$0xf]
          %v467 = vld [vmem:[%s1 + $0x130] sm:$0xf]
          %v468 = vld [vmem:[%s1 + $0x134] sm:$0xf]
          %v469 = vld [vmem:[%s1 + $0x138] sm:$0xf]
          %v470 = vld [vmem:[%s1 + $0x13c] sm:$0xf]
          %v471 = vld [vmem:[%s2] sm:$0x1]
          %v473 = vperm.slane %v471, 0
          %v523 = vunpack.c.l.b16 %v343
          %v524 = vunpack.c.h.b16 %v343
          %v525 = vunpack.c.l.b16 %v344
          %v526 = vunpack.c.h.b16 %v344
          %v527 = vunpack.c.l.b16 %v345
          %v528 = vunpack.c.l.b16 %v346
          %v529 = vunpack.c.h.b16 %v346
          %v530 = vunpack.c.l.b16 %v347
          %v531 = vunpack.c.h.b16 %v347
          %v532 = vunpack.c.l.b16 %v348
          %v533 = vunpack.c.l.b16 %v349
          %v534 = vunpack.c.h.b16 %v349
          %v535 = vunpack.c.l.b16 %v350
          %v536 = vunpack.c.h.b16 %v350
          %v537 = vunpack.c.l.b16 %v351
          %v538 = vunpack.c.l.b16 %v352
          %v539 = vunpack.c.h.b16 %v352
          %v540 = vunpack.c.l.b16 %v353
          %v541 = vunpack.c.h.b16 %v353
          %v542 = vunpack.c.l.b16 %v354
          %v543 = vunpack.c.l.b16 %v355
          %v544 = vunpack.c.h.b16 %v355
          %v545 = vunpack.c.l.b16 %v356
          %v546 = vunpack.c.h.b16 %v356
          %v547 = vunpack.c.l.b16 %v357
          %v548 = vunpack.c.l.b16 %v358
          %v549 = vunpack.c.h.b16 %v358
          %v550 = vunpack.c.l.b16 %v359
          %v551 = vunpack.c.h.b16 %v359
          %v552 = vunpack.c.l.b16 %v360
          %v553 = vunpack.c.l.b16 %v361
          %v554 = vunpack.c.h.b16 %v361
          %v555 = vunpack.c.l.b16 %v362
          %v556 = vunpack.c.h.b16 %v362
          %v557 = vunpack.c.l.b16 %v363
          %v558 = vunpack.c.l.b16 %v364
          %v559 = vunpack.c.h.b16 %v364
          %v560 = vunpack.c.l.b16 %v365
          %v561 = vunpack.c.h.b16 %v365
          %v562 = vunpack.c.l.b16 %v366
          %v563 = vunpack.c.l.b16 %v367
          %v564 = vunpack.c.h.b16 %v367
          %v565 = vunpack.c.l.b16 %v368
          %v566 = vunpack.c.h.b16 %v368
          %v567 = vunpack.c.l.b16 %v369
          %v568 = vunpack.c.l.b16 %v370
          %v569 = vunpack.c.h.b16 %v370
          %v570 = vunpack.c.l.b16 %v371
          %v571 = vunpack.c.h.b16 %v371
          %v572 = vunpack.c.l.b16 %v372
          %v573 = vunpack.c.l.b16 %v373
          %v574 = vunpack.c.h.b16 %v373
          %v575 = vunpack.c.l.b16 %v374
          %v576 = vunpack.c.h.b16 %v374
          %v577 = vunpack.c.l.b16 %v375
          %v578 = vunpack.c.l.b16 %v376
          %v579 = vunpack.c.h.b16 %v376
          %v580 = vunpack.c.l.b16 %v377
          %v581 = vunpack.c.h.b16 %v377
          %v582 = vunpack.c.l.b16 %v378
          %v583 = vunpack.c.l.b16 %v379
          %v584 = vunpack.c.h.b16 %v379
          %v585 = vunpack.c.l.b16 %v380
          %v586 = vunpack.c.h.b16 %v380
          %v587 = vunpack.c.l.b16 %v381
          %v588 = vunpack.c.l.b16 %v382
          %v589 = vunpack.c.h.b16 %v382
          %v590 = vunpack.c.l.b16 %v383
          %v591 = vunpack.c.h.b16 %v383
          %v592 = vunpack.c.l.b16 %v384
          %v593 = vunpack.c.l.b16 %v385
          %v594 = vunpack.c.h.b16 %v385
          %v595 = vunpack.c.l.b16 %v386
          %v596 = vunpack.c.h.b16 %v386
          %v597 = vunpack.c.l.b16 %v387
          %v598 = vunpack.c.l.b16 %v388
          %v599 = vunpack.c.h.b16 %v388
          %v600 = vunpack.c.l.b16 %v389
          %v601 = vunpack.c.h.b16 %v389
          %v602 = vunpack.c.l.b16 %v390
          %v603 = vpack.c.b16 %v528, %v523
          %v604 = vpack.c.b16 %v529, %v524
          %v605 = vpack.c.b16 %v530, %v525
          %v606 = vpack.c.b16 %v531, %v526
          %v607 = vpack.c.b16 %v532, %v527
          %v608 = vpack.c.b16 %v538, %v533
          %v609 = vpack.c.b16 %v539, %v534
          %v610 = vpack.c.b16 %v540, %v535
          %v611 = vpack.c.b16 %v541, %v536
          %v612 = vpack.c.b16 %v542, %v537
          %v613 = vpack.c.b16 %v548, %v543
          %v614 = vpack.c.b16 %v549, %v544
          %v615 = vpack.c.b16 %v550, %v545
          %v616 = vpack.c.b16 %v551, %v546
          %v617 = vpack.c.b16 %v552, %v547
          %v618 = vpack.c.b16 %v558, %v553
          %v619 = vpack.c.b16 %v559, %v554
          %v620 = vpack.c.b16 %v560, %v555
          %v621 = vpack.c.b16 %v561, %v556
          %v622 = vpack.c.b16 %v562, %v557
          %v623 = vpack.c.b16 %v568, %v563
          %v624 = vpack.c.b16 %v569, %v564
          %v625 = vpack.c.b16 %v570, %v565
          %v626 = vpack.c.b16 %v571, %v566
          %v627 = vpack.c.b16 %v572, %v567
          %v628 = vpack.c.b16 %v578, %v573
          %v629 = vpack.c.b16 %v579, %v574
          %v630 = vpack.c.b16 %v580, %v575
          %v631 = vpack.c.b16 %v581, %v576
          %v632 = vpack.c.b16 %v582, %v577
          %v633 = vpack.c.b16 %v588, %v583
          %v634 = vpack.c.b16 %v589, %v584
          %v635 = vpack.c.b16 %v590, %v585
          %v636 = vpack.c.b16 %v591, %v586
          %v637 = vpack.c.b16 %v592, %v587
          %v638 = vpack.c.b16 %v598, %v593
          %v639 = vpack.c.b16 %v599, %v594
          %v640 = vpack.c.b16 %v600, %v595
          %v641 = vpack.c.b16 %v601, %v596
          %v642 = vpack.c.b16 %v602, %v597
          %v763 = vunpack.c.l.b16 %v391
          %v764 = vunpack.c.l.b16 %v392
          %v765 = vunpack.c.l.b16 %v393
          %v766 = vunpack.c.l.b16 %v394
          %v767 = vunpack.c.l.b16 %v395
          %v768 = vunpack.c.l.b16 %v396
          %v769 = vunpack.c.l.b16 %v397
          %v770 = vunpack.c.l.b16 %v398
          %v771 = vunpack.c.l.b16 %v399
          %v772 = vunpack.c.l.b16 %v400
          %v773 = vunpack.c.l.b16 %v401
          %v774 = vunpack.c.l.b16 %v402
          %v775 = vunpack.c.l.b16 %v403
          %v776 = vunpack.c.l.b16 %v404
          %v777 = vunpack.c.l.b16 %v405
          %v778 = vunpack.c.l.b16 %v406
          %v779 = vunpack.c.l.b16 %v407
          %v780 = vunpack.c.l.b16 %v408
          %v781 = vunpack.c.l.b16 %v409
          %v782 = vunpack.c.l.b16 %v410
          %v783 = vunpack.c.l.b16 %v411
          %v784 = vunpack.c.l.b16 %v412
          %v785 = vunpack.c.l.b16 %v413
          %v786 = vunpack.c.l.b16 %v414
          %v787 = vunpack.c.l.b16 %v415
          %v788 = vunpack.c.l.b16 %v416
          %v789 = vunpack.c.l.b16 %v417
          %v790 = vunpack.c.l.b16 %v418
          %v791 = vunpack.c.l.b16 %v419
          %v792 = vunpack.c.l.b16 %v420
          %v793 = vunpack.c.l.b16 %v421
          %v794 = vunpack.c.l.b16 %v422
          %v795 = vunpack.c.l.b16 %v423
          %v796 = vunpack.c.l.b16 %v424
          %v797 = vunpack.c.l.b16 %v425
          %v798 = vunpack.c.l.b16 %v426
          %v799 = vunpack.c.l.b16 %v427
          %v800 = vunpack.c.l.b16 %v428
          %v801 = vunpack.c.l.b16 %v429
          %v802 = vunpack.c.l.b16 %v430
          %v803 = vunpack.c.l.b16 %v431
          %v804 = vunpack.c.l.b16 %v432
          %v805 = vunpack.c.l.b16 %v433
          %v806 = vunpack.c.l.b16 %v434
          %v807 = vunpack.c.l.b16 %v435
          %v808 = vunpack.c.l.b16 %v436
          %v809 = vunpack.c.l.b16 %v437
          %v810 = vunpack.c.l.b16 %v438
          %v811 = vunpack.c.l.b16 %v439
          %v812 = vunpack.c.l.b16 %v440
          %v813 = vunpack.c.l.b16 %v441
          %v814 = vunpack.c.l.b16 %v442
          %v815 = vunpack.c.l.b16 %v443
          %v816 = vunpack.c.l.b16 %v444
          %v817 = vunpack.c.l.b16 %v445
          %v818 = vunpack.c.l.b16 %v446
          %v819 = vunpack.c.l.b16 %v447
          %v820 = vunpack.c.l.b16 %v448
          %v821 = vunpack.c.l.b16 %v449
          %v822 = vunpack.c.l.b16 %v450
          %v823 = vunpack.c.l.b16 %v451
          %v824 = vunpack.c.l.b16 %v452
          %v825 = vunpack.c.l.b16 %v453
          %v826 = vunpack.c.l.b16 %v454
          %v827 = vunpack.c.l.b16 %v455
          %v828 = vunpack.c.l.b16 %v456
          %v829 = vunpack.c.l.b16 %v457
          %v830 = vunpack.c.l.b16 %v458
          %v831 = vunpack.c.l.b16 %v459
          %v832 = vunpack.c.l.b16 %v460
          %v833 = vunpack.c.l.b16 %v461
          %v834 = vunpack.c.l.b16 %v462
          %v835 = vunpack.c.l.b16 %v463
          %v836 = vunpack.c.l.b16 %v464
          %v837 = vunpack.c.l.b16 %v465
          %v838 = vunpack.c.l.b16 %v466
          %v839 = vunpack.c.l.b16 %v467
          %v840 = vunpack.c.l.b16 %v468
          %v841 = vunpack.c.l.b16 %v469
          %v842 = vunpack.c.l.b16 %v470
          %v843 = vpack.c.b16 %v764, %v763
          %v844 = vpack.c.b16 %v766, %v765
          %v845 = vpack.c.b16 %v768, %v767
          %v846 = vpack.c.b16 %v770, %v769
          %v847 = vpack.c.b16 %v772, %v771
          %v848 = vpack.c.b16 %v774, %v773
          %v849 = vpack.c.b16 %v776, %v775
          %v850 = vpack.c.b16 %v778, %v777
          %v851 = vpack.c.b16 %v780, %v779
          %v852 = vpack.c.b16 %v782, %v781
          %v853 = vpack.c.b16 %v784, %v783
          %v854 = vpack.c.b16 %v786, %v785
          %v855 = vpack.c.b16 %v788, %v787
          %v856 = vpack.c.b16 %v790, %v789
          %v857 = vpack.c.b16 %v792, %v791
          %v858 = vpack.c.b16 %v794, %v793
          %v859 = vpack.c.b16 %v796, %v795
          %v860 = vpack.c.b16 %v798, %v797
          %v861 = vpack.c.b16 %v800, %v799
          %v862 = vpack.c.b16 %v802, %v801
          %v863 = vpack.c.b16 %v804, %v803
          %v864 = vpack.c.b16 %v806, %v805
          %v865 = vpack.c.b16 %v808, %v807
          %v866 = vpack.c.b16 %v810, %v809
          %v867 = vpack.c.b16 %v812, %v811
          %v868 = vpack.c.b16 %v814, %v813
          %v869 = vpack.c.b16 %v816, %v815
          %v870 = vpack.c.b16 %v818, %v817
          %v871 = vpack.c.b16 %v820, %v819
          %v872 = vpack.c.b16 %v822, %v821
          %v873 = vpack.c.b16 %v824, %v823
          %v874 = vpack.c.b16 %v826, %v825
          %v875 = vpack.c.b16 %v828, %v827
          %v876 = vpack.c.b16 %v830, %v829
          %v877 = vpack.c.b16 %v832, %v831
          %v878 = vpack.c.b16 %v834, %v833
          %v879 = vpack.c.b16 %v836, %v835
          %v880 = vpack.c.b16 %v838, %v837
          %v881 = vpack.c.b16 %v840, %v839
          %v882 = vpack.c.b16 %v842, %v841
          %923 = vmatpush.bf16.msra.mxu0 %v850
          %924 = vmatpush.bf16.msra.mxu0 %v849
          %925 = vmatpush.bf16.msra.mxu0 %v848
          %926 = vmatpush.bf16.msra.mxu0 %v847
          %927 = vmatpush.bf16.msra.mxu0 %v846
          %928 = vmatpush.bf16.msra.mxu0 %v845
          %929 = vmatpush.bf16.msra.mxu0 %v844
          %930 = vmatpush.bf16.msra.mxu0 %v843
          %931 = vmatmul.bf16.gmra.mxu0 %v603
          %v932 = vpop.f32.mrf.mxu0
          %v933 = vadd.f32 %v473, %v932
          %v934 = vpop.f32.mrf.mxu0
          %v935 = vadd.f32 %v473, %v934
          %936 = vmatmul.bf16.gmra.mxu0 %v608
          %v937 = vpop.f32.mrf.mxu0
          %v938 = vadd.f32 %v473, %v937
          %v939 = vpop.f32.mrf.mxu0
          %v940 = vadd.f32 %v473, %v939
          %941 = vmatmul.bf16.gmra.mxu0 %v613
          %v942 = vpop.f32.mrf.mxu0
          %v943 = vadd.f32 %v473, %v942
          %v944 = vpop.f32.mrf.mxu0
          %v945 = vadd.f32 %v473, %v944
          %946 = vmatmul.bf16.gmra.mxu0 %v618
          %v947 = vpop.f32.mrf.mxu0
          %v948 = vadd.f32 %v473, %v947
          %v949 = vpop.f32.mrf.mxu0
          %v950 = vadd.f32 %v473, %v949
          %951 = vmatmul.bf16.gmra.mxu0 %v623
          %v952 = vpop.f32.mrf.mxu0
          %v953 = vadd.f32 %v473, %v952
          %v954 = vpop.f32.mrf.mxu0
          %v955 = vadd.f32 %v473, %v954
          %956 = vmatmul.bf16.gmra.mxu0 %v628
          %v957 = vpop.f32.mrf.mxu0
          %v958 = vadd.f32 %v473, %v957
          %v959 = vpop.f32.mrf.mxu0
          %v960 = vadd.f32 %v473, %v959
          %961 = vmatmul.bf16.gmra.mxu0 %v633
          %v962 = vpop.f32.mrf.mxu0
          %v963 = vadd.f32 %v473, %v962
          %v964 = vpop.f32.mrf.mxu0
          %v965 = vadd.f32 %v473, %v964
          %966 = vmatmul.bf16.gmra.mxu0 %v638
          %v967 = vpop.f32.mrf.mxu0
          %v968 = vadd.f32 %v473, %v967
          %v969 = vpop.f32.mrf.mxu0
          %v970 = vadd.f32 %v473, %v969
          %971 = vdwg.mxu0
          %972 = vmatpush.bf16.msra.mxu0 %v858
          %973 = vmatpush.bf16.msra.mxu0 %v857
          %974 = vmatpush.bf16.msra.mxu0 %v856
          %975 = vmatpush.bf16.msra.mxu0 %v855
          %976 = vmatpush.bf16.msra.mxu0 %v854
          %977 = vmatpush.bf16.msra.mxu0 %v853
          %978 = vmatpush.bf16.msra.mxu0 %v852
          %979 = vmatpush.bf16.msra.mxu0 %v851
          %980 = vmatmul.bf16.gmra.mxu0 %v604
          %v981 = vpop.f32.mrf.mxu0
          %v982 = vadd.f32 %v933, %v981
          %v983 = vpop.f32.mrf.mxu0
          %v984 = vadd.f32 %v935, %v983
          %985 = vmatmul.bf16.gmra.mxu0 %v609
          %v986 = vpop.f32.mrf.mxu0
          %v987 = vadd.f32 %v938, %v986
          %v988 = vpop.f32.mrf.mxu0
          %v989 = vadd.f32 %v940, %v988
          %990 = vmatmul.bf16.gmra.mxu0 %v614
          %v991 = vpop.f32.mrf.mxu0
          %v992 = vadd.f32 %v943, %v991
          %v993 = vpop.f32.mrf.mxu0
          %v994 = vadd.f32 %v945, %v993
          %995 = vmatmul.bf16.gmra.mxu0 %v619
          %v996 = vpop.f32.mrf.mxu0
          %v997 = vadd.f32 %v948, %v996
          %v998 = vpop.f32.mrf.mxu0
          %v999 = vadd.f32 %v950, %v998
          %1000 = vmatmul.bf16.gmra.mxu0 %v624
          %v1001 = vpop.f32.mrf.mxu0
          %v1002 = vadd.f32 %v953, %v1001
          %v1003 = vpop.f32.mrf.mxu0
          %v1004 = vadd.f32 %v955, %v1003
          %1005 = vmatmul.bf16.gmra.mxu0 %v629
          %v1006 = vpop.f32.mrf.mxu0
          %v1007 = vadd.f32 %v958, %v1006
          %v1008 = vpop.f32.mrf.mxu0
          %v1009 = vadd.f32 %v960, %v1008
          %1010 = vmatmul.bf16.gmra.mxu0 %v634
          %v1011 = vpop.f32.mrf.mxu0
          %v1012 = vadd.f32 %v963, %v1011
          %v1013 = vpop.f32.mrf.mxu0
          %v1014 = vadd.f32 %v965, %v1013
          %1015 = vmatmul.bf16.gmra.mxu0 %v639
          %v1016 = vpop.f32.mrf.mxu0
          %v1017 = vadd.f32 %v968, %v1016
          %v1018 = vpop.f32.mrf.mxu0
          %v1019 = vadd.f32 %v970, %v1018
          %1020 = vdwg.mxu0
          %1021 = vmatpush.bf16.msra.mxu0 %v866
          %1022 = vmatpush.bf16.msra.mxu0 %v865
          %1023 = vmatpush.bf16.msra.mxu0 %v864
          %1024 = vmatpush.bf16.msra.mxu0 %v863
          %1025 = vmatpush.bf16.msra.mxu0 %v862
          %1026 = vmatpush.bf16.msra.mxu0 %v861
          %1027 = vmatpush.bf16.msra.mxu0 %v860
          %1028 = vmatpush.bf16.msra.mxu0 %v859
          %1029 = vmatmul.bf16.gmra.mxu0 %v605
          %v1030 = vpop.f32.mrf.mxu0
          %v1031 = vadd.f32 %v982, %v1030
          %v1032 = vpop.f32.mrf.mxu0
          %v1033 = vadd.f32 %v984, %v1032
          %1034 = vmatmul.bf16.gmra.mxu0 %v610
          %v1035 = vpop.f32.mrf.mxu0
          %v1036 = vadd.f32 %v987, %v1035
          %v1037 = vpop.f32.mrf.mxu0
          %v1038 = vadd.f32 %v989, %v1037
          %1039 = vmatmul.bf16.gmra.mxu0 %v615
          %v1040 = vpop.f32.mrf.mxu0
          %v1041 = vadd.f32 %v992, %v1040
          %v1042 = vpop.f32.mrf.mxu0
          %v1043 = vadd.f32 %v994, %v1042
          %1044 = vmatmul.bf16.gmra.mxu0 %v620
          %v1045 = vpop.f32.mrf.mxu0
          %v1046 = vadd.f32 %v997, %v1045
          %v1047 = vpop.f32.mrf.mxu0
          %v1048 = vadd.f32 %v999, %v1047
          %1049 = vmatmul.bf16.gmra.mxu0 %v625
          %v1050 = vpop.f32.mrf.mxu0
          %v1051 = vadd.f32 %v1002, %v1050
          %v1052 = vpop.f32.mrf.mxu0
          %v1053 = vadd.f32 %v1004, %v1052
          %1054 = vmatmul.bf16.gmra.mxu0 %v630
          %v1055 = vpop.f32.mrf.mxu0
          %v1056 = vadd.f32 %v1007, %v1055
          %v1057 = vpop.f32.mrf.mxu0
          %v1058 = vadd.f32 %v1009, %v1057
          %1059 = vmatmul.bf16.gmra.mxu0 %v635
          %v1060 = vpop.f32.mrf.mxu0
          %v1061 = vadd.f32 %v1012, %v1060
          %v1062 = vpop.f32.mrf.mxu0
          %v1063 = vadd.f32 %v1014, %v1062
          %1064 = vmatmul.bf16.gmra.mxu0 %v640
          %v1065 = vpop.f32.mrf.mxu0
          %v1066 = vadd.f32 %v1017, %v1065
          %v1067 = vpop.f32.mrf.mxu0
          %v1068 = vadd.f32 %v1019, %v1067
          %1069 = vdwg.mxu0
          %1070 = vmatpush.bf16.msra.mxu0 %v874
          %1071 = vmatpush.bf16.msra.mxu0 %v873
          %1072 = vmatpush.bf16.msra.mxu0 %v872
          %1073 = vmatpush.bf16.msra.mxu0 %v871
          %1074 = vmatpush.bf16.msra.mxu0 %v870
          %1075 = vmatpush.bf16.msra.mxu0 %v869
          %1076 = vmatpush.bf16.msra.mxu0 %v868
          %1077 = vmatpush.bf16.msra.mxu0 %v867
          %1078 = vmatmul.bf16.gmra.mxu0 %v606
          %v1079 = vpop.f32.mrf.mxu0
          %v1080 = vadd.f32 %v1031, %v1079
          %v1081 = vpop.f32.mrf.mxu0
          %v1082 = vadd.f32 %v1033, %v1081
          %1083 = vmatmul.bf16.gmra.mxu0 %v611
          %v1084 = vpop.f32.mrf.mxu0
          %v1085 = vadd.f32 %v1036, %v1084
          %v1086 = vpop.f32.mrf.mxu0
          %v1087 = vadd.f32 %v1038, %v1086
          %1088 = vmatmul.bf16.gmra.mxu0 %v616
          %v1089 = vpop.f32.mrf.mxu0
          %v1090 = vadd.f32 %v1041, %v1089
          %v1091 = vpop.f32.mrf.mxu0
          %v1092 = vadd.f32 %v1043, %v1091
          %1093 = vmatmul.bf16.gmra.mxu0 %v621
          %v1094 = vpop.f32.mrf.mxu0
          %v1095 = vadd.f32 %v1046, %v1094
          %v1096 = vpop.f32.mrf.mxu0
          %v1097 = vadd.f32 %v1048, %v1096
          %1098 = vmatmul.bf16.gmra.mxu0 %v626
          %v1099 = vpop.f32.mrf.mxu0
          %v1100 = vadd.f32 %v1051, %v1099
          %v1101 = vpop.f32.mrf.mxu0
          %v1102 = vadd.f32 %v1053, %v1101
          %1103 = vmatmul.bf16.gmra.mxu0 %v631
          %v1104 = vpop.f32.mrf.mxu0
          %v1105 = vadd.f32 %v1056, %v1104
          %v1106 = vpop.f32.mrf.mxu0
          %v1107 = vadd.f32 %v1058, %v1106
          %1108 = vmatmul.bf16.gmra.mxu0 %v636
          %v1109 = vpop.f32.mrf.mxu0
          %v1110 = vadd.f32 %v1061, %v1109
          %v1111 = vpop.f32.mrf.mxu0
          %v1112 = vadd.f32 %v1063, %v1111
          %1113 = vmatmul.bf16.gmra.mxu0 %v641
          %v1114 = vpop.f32.mrf.mxu0
          %v1115 = vadd.f32 %v1066, %v1114
          %v1116 = vpop.f32.mrf.mxu0
          %v1117 = vadd.f32 %v1068, %v1116
          %1118 = vdwg.mxu0
          %1119 = vmatpush.bf16.msra.mxu0 %v882
          %1120 = vmatpush.bf16.msra.mxu0 %v881
          %1121 = vmatpush.bf16.msra.mxu0 %v880
          %1122 = vmatpush.bf16.msra.mxu0 %v879
          %1123 = vmatpush.bf16.msra.mxu0 %v878
          %1124 = vmatpush.bf16.msra.mxu0 %v877
          %1125 = vmatpush.bf16.msra.mxu0 %v876
          %1126 = vmatpush.bf16.msra.mxu0 %v875
          %1127 = vmatmul.bf16.gmra.mxu0 %v607
          %v1128 = vpop.f32.mrf.mxu0
          %v1129 = vadd.f32 %v1080, %v1128
          %v1130 = vpop.f32.mrf.mxu0
          %v1131 = vadd.f32 %v1082, %v1130
          %1132 = vmatmul.bf16.gmra.mxu0 %v612
          %v1133 = vpop.f32.mrf.mxu0
          %v1134 = vadd.f32 %v1085, %v1133
          %v1135 = vpop.f32.mrf.mxu0
          %v1136 = vadd.f32 %v1087, %v1135
          %1137 = vmatmul.bf16.gmra.mxu0 %v617
          %v1138 = vpop.f32.mrf.mxu0
          %v1139 = vadd.f32 %v1090, %v1138
          %v1140 = vpop.f32.mrf.mxu0
          %v1141 = vadd.f32 %v1092, %v1140
          %1142 = vmatmul.bf16.gmra.mxu0 %v622
          %v1143 = vpop.f32.mrf.mxu0
          %v1144 = vadd.f32 %v1095, %v1143
          %v1145 = vpop.f32.mrf.mxu0
          %v1146 = vadd.f32 %v1097, %v1145
          %1147 = vmatmul.bf16.gmra.mxu0 %v627
          %v1148 = vpop.f32.mrf.mxu0
          %v1149 = vadd.f32 %v1100, %v1148
          %v1150 = vpop.f32.mrf.mxu0
          %v1151 = vadd.f32 %v1102, %v1150
          %1152 = vmatmul.bf16.gmra.mxu0 %v632
          %v1153 = vpop.f32.mrf.mxu0
          %v1154 = vadd.f32 %v1105, %v1153
          %v1155 = vpop.f32.mrf.mxu0
          %v1156 = vadd.f32 %v1107, %v1155
          %1157 = vmatmul.bf16.gmra.mxu0 %v637
          %v1158 = vpop.f32.mrf.mxu0
          %v1159 = vadd.f32 %v1110, %v1158
          %v1160 = vpop.f32.mrf.mxu0
          %v1161 = vadd.f32 %v1112, %v1160
          %1162 = vmatmul.bf16.gmra.mxu0 %v642
          %v1163 = vpop.f32.mrf.mxu0
          %v1164 = vadd.f32 %v1115, %v1163
          %v1165 = vpop.f32.mrf.mxu0
          %v1166 = vadd.f32 %v1117, %v1165
          %1167 = vdwg.mxu0
          %v1168 = vmax.f32 %v1129, 0.0
          %v1169 = vmax.f32 %v1131, 0.0
          %v1170 = vmax.f32 %v1134, 0.0
          %v1171 = vmax.f32 %v1136, 0.0
          %v1172 = vmax.f32 %v1139, 0.0
          %v1173 = vmax.f32 %v1141, 0.0
          %v1174 = vmax.f32 %v1144, 0.0
          %v1175 = vmax.f32 %v1146, 0.0
          %v1176 = vmax.f32 %v1149, 0.0
          %v1177 = vmax.f32 %v1151, 0.0
          %v1178 = vmax.f32 %v1154, 0.0
          %v1179 = vmax.f32 %v1156, 0.0
          %v1180 = vmax.f32 %v1159, 0.0
          %v1181 = vmax.f32 %v1161, 0.0
          %v1182 = vmax.f32 %v1164, 0.0
          %v1183 = vmax.f32 %v1166, 0.0
          %v1184 = vpack.c.bf16 %v1169, %v1168
          %v1185 = vpack.c.bf16 %v1171, %v1170
          %v1186 = vpack.c.bf16 %v1173, %v1172
          %v1187 = vpack.c.bf16 %v1175, %v1174
          %v1188 = vpack.c.bf16 %v1177, %v1176
          %v1189 = vpack.c.bf16 %v1179, %v1178
          %v1190 = vpack.c.bf16 %v1181, %v1180
          %v1191 = vpack.c.bf16 %v1183, %v1182
          %v1192 = vld [vmem:[%s3] sm:$0xf]
          %v1193 = vld [vmem:[%s3 + $0x4] sm:$0xf]
          %v1194 = vld [vmem:[%s3 + $0x8] sm:$0xf]
          %v1195 = vld [vmem:[%s3 + $0xc] sm:$0xf]
          %v1196 = vld [vmem:[%s3 + $0x10] sm:$0xf]
          %v1197 = vld [vmem:[%s3 + $0x14] sm:$0xf]
          %v1198 = vld [vmem:[%s3 + $0x18] sm:$0xf]
          %v1199 = vld [vmem:[%s3 + $0x1c] sm:$0xf]
          %v1200 = vld [vmem:[%s3 + $0x20] sm:$0xf]
          %v1201 = vld [vmem:[%s3 + $0x24] sm:$0xf]
          %v1202 = vld [vmem:[%s3 + $0x28] sm:$0xf]
          %v1203 = vld [vmem:[%s3 + $0x2c] sm:$0xf]
          %v1204 = vld [vmem:[%s3 + $0x30] sm:$0xf]
          %v1205 = vld [vmem:[%s3 + $0x34] sm:$0xf]
          %v1206 = vld [vmem:[%s3 + $0x38] sm:$0xf]
          %v1207 = vld [vmem:[%s3 + $0x3c] sm:$0xf]
          %v1208 = vld [vmem:[%s4] sm:$0x1]
          %v1210 = vperm.slane %v1208, 0
          %v1228 = vunpack.c.l.b16 %v1192
          %v1229 = vunpack.c.l.b16 %v1193
          %v1230 = vunpack.c.l.b16 %v1194
          %v1231 = vunpack.c.l.b16 %v1195
          %v1232 = vunpack.c.l.b16 %v1196
          %v1233 = vunpack.c.l.b16 %v1197
          %v1234 = vunpack.c.l.b16 %v1198
          %v1235 = vunpack.c.l.b16 %v1199
          %v1236 = vunpack.c.l.b16 %v1200
          %v1237 = vunpack.c.l.b16 %v1201
          %v1238 = vunpack.c.l.b16 %v1202
          %v1239 = vunpack.c.l.b16 %v1203
          %v1240 = vunpack.c.l.b16 %v1204
          %v1241 = vunpack.c.l.b16 %v1205
          %v1242 = vunpack.c.l.b16 %v1206
          %v1243 = vunpack.c.l.b16 %v1207
          %v1244 = vpack.c.b16 %v1229, %v1228
          %v1245 = vpack.c.b16 %v1231, %v1230
          %v1246 = vpack.c.b16 %v1233, %v1232
          %v1247 = vpack.c.b16 %v1235, %v1234
          %v1248 = vpack.c.b16 %v1237, %v1236
          %v1249 = vpack.c.b16 %v1239, %v1238
          %v1250 = vpack.c.b16 %v1241, %v1240
          %v1251 = vpack.c.b16 %v1243, %v1242
          %1260 = vmatpush.bf16.msra.mxu0 %v1251
          %1261 = vmatpush.bf16.msra.mxu0 %v1250
          %1262 = vmatpush.bf16.msra.mxu0 %v1249
          %1263 = vmatpush.bf16.msra.mxu0 %v1248
          %1264 = vmatpush.bf16.msra.mxu0 %v1247
          %1265 = vmatpush.bf16.msra.mxu0 %v1246
          %1266 = vmatpush.bf16.msra.mxu0 %v1245
          %1267 = vmatpush.bf16.msra.mxu0 %v1244
          %1268 = vmatmul.bf16.gmra.mxu0 %v1184
          %v1269 = vpop.f32.mrf.mxu0
          %v1270 = vadd.f32 %v1210, %v1269
          %v1271 = vpop.f32.mrf.mxu0
          %v1272 = vadd.f32 %v1210, %v1271
          %1273 = vmatmul.bf16.gmra.mxu0 %v1185
          %v1274 = vpop.f32.mrf.mxu0
          %v1275 = vadd.f32 %v1210, %v1274
          %v1276 = vpop.f32.mrf.mxu0
          %v1277 = vadd.f32 %v1210, %v1276
          %1278 = vmatmul.bf16.gmra.mxu0 %v1186
          %v1279 = vpop.f32.mrf.mxu0
          %v1280 = vadd.f32 %v1210, %v1279
          %v1281 = vpop.f32.mrf.mxu0
          %v1282 = vadd.f32 %v1210, %v1281
          %1283 = vmatmul.bf16.gmra.mxu0 %v1187
          %v1284 = vpop.f32.mrf.mxu0
          %v1285 = vadd.f32 %v1210, %v1284
          %v1286 = vpop.f32.mrf.mxu0
          %v1287 = vadd.f32 %v1210, %v1286
          %1288 = vmatmul.bf16.gmra.mxu0 %v1188
          %v1289 = vpop.f32.mrf.mxu0
          %v1290 = vadd.f32 %v1210, %v1289
          %v1291 = vpop.f32.mrf.mxu0
          %v1292 = vadd.f32 %v1210, %v1291
          %1293 = vmatmul.bf16.gmra.mxu0 %v1189
          %v1294 = vpop.f32.mrf.mxu0
          %v1295 = vadd.f32 %v1210, %v1294
          %v1296 = vpop.f32.mrf.mxu0
          %v1297 = vadd.f32 %v1210, %v1296
          %1298 = vmatmul.bf16.gmra.mxu0 %v1190
          %v1299 = vpop.f32.mrf.mxu0
          %v1300 = vadd.f32 %v1210, %v1299
          %v1301 = vpop.f32.mrf.mxu0
          %v1302 = vadd.f32 %v1210, %v1301
          %1303 = vmatmul.bf16.gmra.mxu0 %v1191
          %v1304 = vpop.f32.mrf.mxu0
          %v1305 = vadd.f32 %v1210, %v1304
          %v1306 = vpop.f32.mrf.mxu0
          %v1307 = vadd.f32 %v1210, %v1306
          %1308 = vdwg.mxu0
          %v1309 = vmax.f32 %v1270, 0.0
          %v1310 = vmax.f32 %v1272, 0.0
          %v1311 = vmax.f32 %v1275, 0.0
          %v1312 = vmax.f32 %v1277, 0.0
          %v1313 = vmax.f32 %v1280, 0.0
          %v1314 = vmax.f32 %v1282, 0.0
          %v1315 = vmax.f32 %v1285, 0.0
          %v1316 = vmax.f32 %v1287, 0.0
          %v1317 = vmax.f32 %v1290, 0.0
          %v1318 = vmax.f32 %v1292, 0.0
          %v1319 = vmax.f32 %v1295, 0.0
          %v1320 = vmax.f32 %v1297, 0.0
          %v1321 = vmax.f32 %v1300, 0.0
          %v1322 = vmax.f32 %v1302, 0.0
          %v1323 = vmax.f32 %v1305, 0.0
          %v1324 = vmax.f32 %v1307, 0.0
          %v1325 = vpack.c.bf16 %v1309, %v1309
          %v1326 = vpack.c.bf16 %v1310, %v1310
          %v1327 = vpack.c.bf16 %v1311, %v1311
          %v1328 = vpack.c.bf16 %v1312, %v1312
          %v1329 = vpack.c.bf16 %v1313, %v1313
          %v1330 = vpack.c.bf16 %v1314, %v1314
          %v1331 = vpack.c.bf16 %v1315, %v1315
          %v1332 = vpack.c.bf16 %v1316, %v1316
          %v1333 = vpack.c.bf16 %v1317, %v1317
          %v1334 = vpack.c.bf16 %v1318, %v1318
          %v1335 = vpack.c.bf16 %v1319, %v1319
          %v1336 = vpack.c.bf16 %v1320, %v1320
          %v1337 = vpack.c.bf16 %v1321, %v1321
          %v1338 = vpack.c.bf16 %v1322, %v1322
          %v1339 = vpack.c.bf16 %v1323, %v1323
          %v1340 = vpack.c.bf16 %v1324, %v1324
          %1341 = vst [vmem:[#allocation2] sm:$0xf] %v1325
          %1342 = vst [vmem:[#allocation2 + $0x4] sm:$0xf] %v1326
          %1343 = vst [vmem:[#allocation2 + $0x8] sm:$0xf] %v1327
          %1344 = vst [vmem:[#allocation2 + $0xc] sm:$0xf] %v1328
          %1345 = vst [vmem:[#allocation2 + $0x10] sm:$0xf] %v1329
          %1346 = vst [vmem:[#allocation2 + $0x14] sm:$0xf] %v1330
          %1347 = vst [vmem:[#allocation2 + $0x18] sm:$0xf] %v1331
          %1348 = vst [vmem:[#allocation2 + $0x1c] sm:$0xf] %v1332
          %1349 = vst [vmem:[#allocation2 + $0x20] sm:$0xf] %v1333
          %1350 = vst [vmem:[#allocation2 + $0x24] sm:$0xf] %v1334
          %1351 = vst [vmem:[#allocation2 + $0x28] sm:$0xf] %v1335
          %1352 = vst [vmem:[#allocation2 + $0x2c] sm:$0xf] %v1336
          %1353 = vst [vmem:[#allocation2 + $0x30] sm:$0xf] %v1337
          %1354 = vst [vmem:[#allocation2 + $0x34] sm:$0xf] %v1338
          %1355 = vst [vmem:[#allocation2 + $0x38] sm:$0xf] %v1339
          %1356 = vst [vmem:[#allocation2 + $0x3c] sm:$0xf] %v1340
        $region52: #{forward.1} parent=47 // pred_fallthru
          _
        %v1357 = vld [vmem:[#allocation2] sm:$0xf]
        %v1358 = vld [vmem:[#allocation2 + $0x4] sm:$0xf]
        %v1359 = vld [vmem:[#allocation2 + $0x8] sm:$0xf]
        %v1360 = vld [vmem:[#allocation2 + $0xc] sm:$0xf]
        %v1361 = vld [vmem:[#allocation2 + $0x10] sm:$0xf]
        %v1362 = vld [vmem:[#allocation2 + $0x14] sm:$0xf]
        %v1363 = vld [vmem:[#allocation2 + $0x18] sm:$0xf]
        %v1364 = vld [vmem:[#allocation2 + $0x1c] sm:$0xf]
        %v1365 = vld [vmem:[#allocation2 + $0x20] sm:$0xf]
        %v1366 = vld [vmem:[#allocation2 + $0x24] sm:$0xf]
        %v1367 = vld [vmem:[#allocation2 + $0x28] sm:$0xf]
        %v1368 = vld [vmem:[#allocation2 + $0x2c] sm:$0xf]
        %v1369 = vld [vmem:[#allocation2 + $0x30] sm:$0xf]
        %v1370 = vld [vmem:[#allocation2 + $0x34] sm:$0xf]
        %v1371 = vld [vmem:[#allocation2 + $0x38] sm:$0xf]
        %v1372 = vld [vmem:[#allocation2 + $0x3c] sm:$0xf]
        %v1373 = vld [vmem:[%s330] sm:$0xff]
        %v1374 = vld [vmem:[%s330 + $0x8] sm:$0xff]
        %v1375 = vld [vmem:[%s330 + $0x10] sm:$0xff]
        %v1376 = vld [vmem:[%s330 + $0x18] sm:$0xff]
        %v1377 = vld [vmem:[%s330 + $0x20] sm:$0xff]
        %v1378 = vld [vmem:[%s330 + $0x28] sm:$0xff]
        %v1379 = vld [vmem:[%s330 + $0x30] sm:$0xff]
        %v1380 = vld [vmem:[%s330 + $0x38] sm:$0xff]
        %v1381 = vld [vmem:[%s330 + $0x40] sm:$0xff]
        %v1382 = vld [vmem:[%s330 + $0x48] sm:$0xff]
        %v1383 = vld [vmem:[%s330 + $0x50] sm:$0xff]
        %v1384 = vld [vmem:[%s330 + $0x58] sm:$0xff]
        %v1385 = vld [vmem:[%s330 + $0x60] sm:$0xff]
        %v1386 = vld [vmem:[%s330 + $0x68] sm:$0xff]
        %v1387 = vld [vmem:[%s330 + $0x70] sm:$0xff]
        %v1388 = vld [vmem:[%s330 + $0x78] sm:$0xff]
        %v1389 = vld [vmem:[%s335] sm:$0x3]
        %v1391 = vperm.slane %v1389, 0
        %v1392 = vperm.slane %v1389, 1
        %v1411 = vunpack.c.l.b16 %v1357
        %v1412 = vunpack.c.l.b16 %v1358
        %v1413 = vunpack.c.l.b16 %v1359
        %v1414 = vunpack.c.l.b16 %v1360
        %v1415 = vunpack.c.l.b16 %v1361
        %v1416 = vunpack.c.l.b16 %v1362
        %v1417 = vunpack.c.l.b16 %v1363
        %v1418 = vunpack.c.l.b16 %v1364
        %v1419 = vunpack.c.l.b16 %v1365
        %v1420 = vunpack.c.l.b16 %v1366
        %v1421 = vunpack.c.l.b16 %v1367
        %v1422 = vunpack.c.l.b16 %v1368
        %v1423 = vunpack.c.l.b16 %v1369
        %v1424 = vunpack.c.l.b16 %v1370
        %v1425 = vunpack.c.l.b16 %v1371
        %v1426 = vunpack.c.l.b16 %v1372
        %v1427 = vpack.c.b16 %v1412, %v1411
        %v1428 = vpack.c.b16 %v1414, %v1413
        %v1429 = vpack.c.b16 %v1416, %v1415
        %v1430 = vpack.c.b16 %v1418, %v1417
        %v1431 = vpack.c.b16 %v1420, %v1419
        %v1432 = vpack.c.b16 %v1422, %v1421
        %v1433 = vpack.c.b16 %v1424, %v1423
        %v1434 = vpack.c.b16 %v1426, %v1425
        %v1459 = vunpack.c.l.b16 %v1373
        %v1460 = vunpack.c.h.b16 %v1373
        %v1461 = vunpack.c.l.b16 %v1374
        %v1462 = vunpack.c.h.b16 %v1374
        %v1463 = vunpack.c.l.b16 %v1375
        %v1464 = vunpack.c.h.b16 %v1375
        %v1465 = vunpack.c.l.b16 %v1376
        %v1466 = vunpack.c.h.b16 %v1376
        %v1467 = vunpack.c.l.b16 %v1377
        %v1468 = vunpack.c.h.b16 %v1377
        %v1469 = vunpack.c.l.b16 %v1378
        %v1470 = vunpack.c.h.b16 %v1378
        %v1471 = vunpack.c.l.b16 %v1379
        %v1472 = vunpack.c.h.b16 %v1379
        %v1473 = vunpack.c.l.b16 %v1380
        %v1474 = vunpack.c.h.b16 %v1380
        %v1475 = vunpack.c.l.b16 %v1381
        %v1476 = vunpack.c.h.b16 %v1381
        %v1477 = vunpack.c.l.b16 %v1382
        %v1478 = vunpack.c.h.b16 %v1382
        %v1479 = vunpack.c.l.b16 %v1383
        %v1480 = vunpack.c.h.b16 %v1383
        %v1481 = vunpack.c.l.b16 %v1384
        %v1482 = vunpack.c.h.b16 %v1384
        %v1483 = vunpack.c.l.b16 %v1385
        %v1484 = vunpack.c.h.b16 %v1385
        %v1485 = vunpack.c.l.b16 %v1386
        %v1486 = vunpack.c.h.b16 %v1386
        %v1487 = vunpack.c.l.b16 %v1387
        %v1488 = vunpack.c.h.b16 %v1387
        %v1489 = vunpack.c.l.b16 %v1388
        %v1490 = vunpack.c.h.b16 %v1388
        %v1491 = vpack.c.b16 %v1461, %v1459
        %v1492 = vpack.c.b16 %v1462, %v1460
        %v1493 = vpack.c.b16 %v1465, %v1463
        %v1494 = vpack.c.b16 %v1466, %v1464
        %v1495 = vpack.c.b16 %v1469, %v1467
        %v1496 = vpack.c.b16 %v1470, %v1468
        %v1497 = vpack.c.b16 %v1473, %v1471
        %v1498 = vpack.c.b16 %v1474, %v1472
        %v1499 = vpack.c.b16 %v1477, %v1475
        %v1500 = vpack.c.b16 %v1478, %v1476
        %v1501 = vpack.c.b16 %v1481, %v1479
        %v1502 = vpack.c.b16 %v1482, %v1480
        %v1503 = vpack.c.b16 %v1485, %v1483
        %v1504 = vpack.c.b16 %v1486, %v1484
        %v1505 = vpack.c.b16 %v1489, %v1487
        %v1506 = vpack.c.b16 %v1490, %v1488
        %1523 = vmatpush.bf16.msra.mxu0 %v1505
        %1524 = vmatpush.bf16.msra.mxu0 %v1503
        %1525 = vmatpush.bf16.msra.mxu0 %v1501
        %1526 = vmatpush.bf16.msra.mxu0 %v1499
        %1527 = vmatpush.bf16.msra.mxu0 %v1497
        %1528 = vmatpush.bf16.msra.mxu0 %v1495
        %1529 = vmatpush.bf16.msra.mxu0 %v1493
        %1530 = vmatpush.bf16.msra.mxu0 %v1491
        %1531 = vmatmul.bf16.gmra.mxu0 %v1427
        %v1532 = vpop.f32.mrf.mxu0
        %v1533 = vadd.f32 %v1391, %v1532
        %v1534 = vpop.f32.mrf.mxu0
        %v1535 = vadd.f32 %v1391, %v1534
        %1536 = vmatmul.bf16.gmra.mxu0 %v1428
        %v1537 = vpop.f32.mrf.mxu0
        %v1538 = vadd.f32 %v1391, %v1537
        %v1539 = vpop.f32.mrf.mxu0
        %v1540 = vadd.f32 %v1391, %v1539
        %1541 = vmatmul.bf16.gmra.mxu0 %v1429
        %v1542 = vpop.f32.mrf.mxu0
        %v1543 = vadd.f32 %v1391, %v1542
        %v1544 = vpop.f32.mrf.mxu0
        %v1545 = vadd.f32 %v1391, %v1544
        %1546 = vmatmul.bf16.gmra.mxu0 %v1430
        %v1547 = vpop.f32.mrf.mxu0
        %v1548 = vadd.f32 %v1391, %v1547
        %v1549 = vpop.f32.mrf.mxu0
        %v1550 = vadd.f32 %v1391, %v1549
        %1551 = vmatmul.bf16.gmra.mxu0 %v1431
        %v1552 = vpop.f32.mrf.mxu0
        %v1553 = vadd.f32 %v1391, %v1552
        %v1554 = vpop.f32.mrf.mxu0
        %v1555 = vadd.f32 %v1391, %v1554
        %1556 = vmatmul.bf16.gmra.mxu0 %v1432
        %v1557 = vpop.f32.mrf.mxu0
        %v1558 = vadd.f32 %v1391, %v1557
        %v1559 = vpop.f32.mrf.mxu0
        %v1560 = vadd.f32 %v1391, %v1559
        %1561 = vmatmul.bf16.gmra.mxu0 %v1433
        %v1562 = vpop.f32.mrf.mxu0
        %v1563 = vadd.f32 %v1391, %v1562
        %v1564 = vpop.f32.mrf.mxu0
        %v1565 = vadd.f32 %v1391, %v1564
        %1566 = vmatmul.bf16.gmra.mxu0 %v1434
        %v1567 = vpop.f32.mrf.mxu0
        %v1568 = vadd.f32 %v1391, %v1567
        %v1569 = vpop.f32.mrf.mxu0
        %v1570 = vadd.f32 %v1391, %v1569
        %1571 = vdwg.mxu0
        %1572 = vmatpush.bf16.msra.mxu0 %v1506
        %1573 = vmatpush.bf16.msra.mxu0 %v1504
        %1574 = vmatpush.bf16.msra.mxu0 %v1502
        %1575 = vmatpush.bf16.msra.mxu0 %v1500
        %1576 = vmatpush.bf16.msra.mxu0 %v1498
        %1577 = vmatpush.bf16.msra.mxu0 %v1496
        %1578 = vmatpush.bf16.msra.mxu0 %v1494
        %1579 = vmatpush.bf16.msra.mxu0 %v1492
        %1580 = vmatmul.bf16.gmra.mxu0 %v1427
        %v1581 = vpop.f32.mrf.mxu0
        %v1582 = vadd.f32 %v1392, %v1581
        %v1583 = vpop.f32.mrf.mxu0
        %v1584 = vadd.f32 %v1392, %v1583
        %1585 = vmatmul.bf16.gmra.mxu0 %v1428
        %v1586 = vpop.f32.mrf.mxu0
        %v1587 = vadd.f32 %v1392, %v1586
        %v1588 = vpop.f32.mrf.mxu0
        %v1589 = vadd.f32 %v1392, %v1588
        %1590 = vmatmul.bf16.gmra.mxu0 %v1429
        %v1591 = vpop.f32.mrf.mxu0
        %v1592 = vadd.f32 %v1392, %v1591
        %v1593 = vpop.f32.mrf.mxu0
        %v1594 = vadd.f32 %v1392, %v1593
        %1595 = vmatmul.bf16.gmra.mxu0 %v1430
        %v1596 = vpop.f32.mrf.mxu0
        %v1597 = vadd.f32 %v1392, %v1596
        %v1598 = vpop.f32.mrf.mxu0
        %v1599 = vadd.f32 %v1392, %v1598
        %1600 = vmatmul.bf16.gmra.mxu0 %v1431
        %v1601 = vpop.f32.mrf.mxu0
        %v1602 = vadd.f32 %v1392, %v1601
        %v1603 = vpop.f32.mrf.mxu0
        %v1604 = vadd.f32 %v1392, %v1603
        %1605 = vmatmul.bf16.gmra.mxu0 %v1432
        %v1606 = vpop.f32.mrf.mxu0
        %v1607 = vadd.f32 %v1392, %v1606
        %v1608 = vpop.f32.mrf.mxu0
        %v1609 = vadd.f32 %v1392, %v1608
        %1610 = vmatmul.bf16.gmra.mxu0 %v1433
        %v1611 = vpop.f32.mrf.mxu0
        %v1612 = vadd.f32 %v1392, %v1611
        %v1613 = vpop.f32.mrf.mxu0
        %v1614 = vadd.f32 %v1392, %v1613
        %1615 = vmatmul.bf16.gmra.mxu0 %v1434
        %v1616 = vpop.f32.mrf.mxu0
        %v1617 = vadd.f32 %v1392, %v1616
        %v1618 = vpop.f32.mrf.mxu0
        %v1619 = vadd.f32 %v1392, %v1618
        %1620 = vdwg.mxu0
        %1621 = vst [vmem:[%s318] sm:$0xff] %v1533
        %1622 = vst [vmem:[%s318 + $0x8] sm:$0xff] %v1582
        %1623 = vst [vmem:[%s318 + $0x10] sm:$0xff] %v1535
        %1624 = vst [vmem:[%s318 + $0x18] sm:$0xff] %v1584
        %1625 = vst [vmem:[%s318 + $0x20] sm:$0xff] %v1538
        %1626 = vst [vmem:[%s318 + $0x28] sm:$0xff] %v1587
        %1627 = vst [vmem:[%s318 + $0x30] sm:$0xff] %v1540
        %1628 = vst [vmem:[%s318 + $0x38] sm:$0xff] %v1589
        %1629 = vst [vmem:[%s318 + $0x40] sm:$0xff] %v1543
        %1630 = vst [vmem:[%s318 + $0x48] sm:$0xff] %v1592
        %1631 = vst [vmem:[%s318 + $0x50] sm:$0xff] %v1545
        %1632 = vst [vmem:[%s318 + $0x58] sm:$0xff] %v1594
        %1633 = vst [vmem:[%s318 + $0x60] sm:$0xff] %v1548
        %1634 = vst [vmem:[%s318 + $0x68] sm:$0xff] %v1597
        %1635 = vst [vmem:[%s318 + $0x70] sm:$0xff] %v1550
        %1636 = vst [vmem:[%s318 + $0x78] sm:$0xff] %v1599
        %1637 = vst [vmem:[%s318 + $0x80] sm:$0xff] %v1553
        %1638 = vst [vmem:[%s318 + $0x88] sm:$0xff] %v1602
        %1639 = vst [vmem:[%s318 + $0x90] sm:$0xff] %v1555
        %1640 = vst [vmem:[%s318 + $0x98] sm:$0xff] %v1604
        %1641 = vst [vmem:[%s318 + $0xa0] sm:$0xff] %v1558
        %1642 = vst [vmem:[%s318 + $0xa8] sm:$0xff] %v1607
        %1643 = vst [vmem:[%s318 + $0xb0] sm:$0xff] %v1560
        %1644 = vst [vmem:[%s318 + $0xb8] sm:$0xff] %v1609
        %1645 = vst [vmem:[%s318 + $0xc0] sm:$0xff] %v1563
        %1646 = vst [vmem:[%s318 + $0xc8] sm:$0xff] %v1612
        %1647 = vst [vmem:[%s318 + $0xd0] sm:$0xff] %v1565
        %1648 = vst [vmem:[%s318 + $0xd8] sm:$0xff] %v1614
        %1649 = vst [vmem:[%s318 + $0xe0] sm:$0xff] %v1568
        %1650 = vst [vmem:[%s318 + $0xe8] sm:$0xff] %v1617
        %1651 = vst [vmem:[%s318 + $0xf0] sm:$0xff] %v1570
        %1652 = vst [vmem:[%s318 + $0xf8] sm:$0xff] %v1619
        %s1653 = sand.u32 %s205, 1
        %s1654 = scalar_lea.sflag [#allocation4], %s1653
        %s1655 = sand.u32 %s205, 1
        %s1656 = smul.addr %s1655, 256
        %s1657 = scalar_lea.vmem [#allocation3], %s1656
        // Predicated region
        $region53: #{forward.1} parent=47 // pred_check
          %p1658 = pneg %p215
        $region54: #{forward.1} parent=47 // pred_check_branch
          %1660 = sbr.rel (%p1658) target = $region56
        $region55: #{forward.1} parent=47 // pred_region
          %s1661 = smul.u32 16, %s25
          %s1662 = smul.u32 2, %s26
          %1664 = vsyncadd %s1654, 0
          %s1665 = smul.addr %s1661, 2
          %s1666 = sadd.s32 %s1662, %s1665
          %s1667 = smul.addr %s1666, 8
          %s1668 = scalar_lea.hbm %s7, %s1667
          %s1669 = sshll.u32 %s1657, 4
          %s1670 = int_to_ptr.vmem [resolvable:$true] %s1669
          %s1671 = sshll.u32 %s1668, 4
          %s1672 = int_to_ptr.hbm [resolvable:$true] %s1671
          %1677 = dma.vmem_to_hbm [thread:$0]  %s1670, 4096, %s1672, %s1654, 256, 256, 16
        $region56: #{forward.1} parent=47 // pred_fallthru
          _
      $region48: #{forward.1} parent=5 // pred_fallthru
        _
      %p1678 = scmp.le.s32.totalorder 2, %s16
      // Predicated region
      $region57: #{forward.1} parent=5 // pred_check
        %p1679 = pneg %p1678
      $region58: #{forward.1} parent=5 // pred_check_branch
        %1681 = sbr.rel (%p1679) target = $region60
      $region59: #{forward.1} parent=5 // pred_region
        %s1682 = ssub.s32 %s16, 2
        // Predicated region
        $region61: #{forward.1} parent=59 // pred_check
          %p1683 = pneg %p221
        $region62: #{forward.1} parent=59 // pred_check_branch
          %1685 = sbr.rel (%p1683) target = $region64
        $region63: #{forward.1} parent=59 // pred_region
          %s1686 = sand.u32 %s206, 1
          %s1687 = scalar_lea.sflag [#allocation4], %s1686
          %s1688 = sand.u32 %s206, 1
          %s1689 = smul.addr %s1688, 256
          %s1690 = scalar_lea.vmem [#allocation3], %s1689
          %1692 = dma.done %s1687, 4096
        $region64: #{forward.1} parent=59 // pred_fallthru
          _
      $region60: #{forward.1} parent=5 // pred_fallthru
        _
    $region6: #{forward.1} parent=1 // loop_footer
      %s20 = sadd.s32 1, %s16
    $region7: #{forward.1} parent=1 // loop_footer_branch
      %15 = sbr.rel target = $region3
    $region8: #{forward.1} parent=1 // loop_exit
      _
    %1693 = vsyncpa [#allocation4], 1
    %s1694 = scalar_lea.sflag [#allocation4], 1
    %1695 = vsyncpa %s1694, 1

</llo_original>
